<compile_context>
chip_gen: v7x
topology: tpu7x:2x2x1
jax: 0.10.0
libtpu: 0.0.40
codegen_flags: <defaults>
</compile_context>

<pallas_src>
import functools

import jax
import jax.numpy as jnp
from jax.experimental import pallas as pl
from jax.experimental.pallas import tpu as pltpu


# ---------------------------------------------------------------------------
# Kernel
# ---------------------------------------------------------------------------
def _zero_halo_rows(ref, n_img, hp, h):
    """Zero the per-image top/bottom halo rows of a stacked activation buffer.

    Layout: image b occupies rows [b*hp+1, b*hp+h]; rows b*hp and b*hp+h+1 are
    its zero halos (the halos of consecutive images are adjacent, forming
    2-row separator strips).  All writes are full-lane, unmasked row stores.
    """
    cols = ref.shape[1]
    one = jnp.zeros((1, cols), ref.dtype)
    two = jnp.zeros((2, cols), ref.dtype)
    ref[0:1, :] = one                                  # top halo of image 0
    ref[n_img * hp - 1:n_img * hp, :] = one            # bottom halo of last image
    for b in range(n_img - 1):                         # interior separator pairs
        r = b * hp + h + 1
        ref[r:r + 2, :] = two


def _conv3x3_bn_relu(xp, w_ref, s_ref, b_ref, n_rows, row_stride=1):
    """3x3 conv as 3 row-matmuls against dx-folded bf16 weights, followed by
    the folded conv-bias/BatchNorm affine + ReLU (f32 epilogue).

    For the stride-2 stage the LHS rows are read with a stride-2 ref read, so
    only the kept output rows ever reach the MXU."""
    acc = None
    for dy in range(3):
        if row_stride == 1:
            lhs = xp[dy:dy + n_rows, :]
        else:
            lhs = xp[pl.ds(dy, n_rows, stride=row_stride), :]
        part = jnp.dot(lhs.astype(jnp.bfloat16), w_ref[dy],
                       preferred_element_type=jnp.float32)
        acc = part if acc is None else acc + part
    return jnp.maximum(acc * s_ref[...] + b_ref[...], 0.0)


def _fused_kernel(x_ref, w1_ref, s1_ref, b1_ref,
                  w2_ref, s2_ref, b2_ref,
                  w3_ref, s3_ref, b3_ref,
                  out_ref, out2_ref,
                  xp1, xp2, *, n_img, H):
    Hp = H + 2
    R = n_img * Hp              # stacked rows incl. per-image halos
    M = R - 2                   # stride-1 conv output rows (incl. junk rows)
    Hd = H // 2
    M2 = R // 2 - 1             # stride-2 conv output rows (incl. junk rows)

    # ---- stage-1 input: stack the images with zero row-halos ---------------
    _zero_halo_rows(xp1, n_img, Hp, H)
    for b in range(n_img):
        xp1[b * Hp + 1:b * Hp + 1 + H, :] = x_ref[b]

    # ---- stage 1: conv3x3(s=1) + BN + ReLU ----------------------------------
    y1 = _conv3x3_bn_relu(xp1, w1_ref, s1_ref, b1_ref, M)       # (M, W*C) f32
    xp2[1:R - 1, :] = y1
    _zero_halo_rows(xp2, n_img, Hp, H)   # re-zero halos clobbered by the store

    # ---- stage 2: conv3x3(s=1) + BN + ReLU ----------------------------------
    y2 = _conv3x3_bn_relu(xp2, w2_ref, s2_ref, b2_ref, M)       # (M, W*C) f32
    for b in range(n_img):
        out_ref[b] = y2[b * Hp:b * Hp + H].astype(out_ref.dtype)

    # Stage-3 input reuses xp2 in place (y2 is fully materialised already).
    xp2[1:R - 1, :] = y2
    _zero_halo_rows(xp2, n_img, Hp, H)

    # ---- stage 3: conv3x3(s=2) + BN + ReLU ----------------------------------
    # W-stride folded into w3's block structure; H-stride taken on the LHS.
    z2 = _conv3x3_bn_relu(xp2, w3_ref, s3_ref, b3_ref, M2, row_stride=2)
    for b in range(n_img):
        i0 = b * (Hp // 2)
        out2_ref[b] = z2[i0:i0 + Hd].astype(out2_ref.dtype)


# ---------------------------------------------------------------------------
# Wrappers
# ---------------------------------------------------------------------------
def fused_conv_stack_planar(x_planar, kparams, W, *, images_per_step=1):
    """x_planar: (N, H, W*C0) lane-dense planar activations (flattened NHWC).
    Returns (out, out_2) in the same planar layout:
      out:   (N, H,    W*C)
      out_2: (N, H//2, (W//2)*C)
    In a full network, keep this planar layout between consecutive conv blocks
    and only convert to/from NCHW at model boundaries.
    """
    (w1, s1, b1), (w2, s2, b2), (w3, s3, b3) = kparams
    N, H, WC0 = x_planar.shape
    C0 = WC0 // W
    # Stage-1 conv is k=3, s=1, p=1 so its Wout == W (inherent to this block).
    C = w1.shape[2] // W
    Hd, Wd = H // 2, W // 2

    assert W * C0 == w1.shape[1], (w1.shape, W, C0)
    assert w2.shape == (3, W * C, W * C), w2.shape
    assert w3.shape == (3, W * C, Wd * C), w3.shape
    assert H % 2 == 0 and W % 2 == 0

    B = images_per_step
    assert N % B == 0, (N, B)
    Hp = H + 2

    kernel = functools.partial(_fused_kernel, n_img=B, H=H)
    dt = x_planar.dtype

    out_p, out2_p = pl.pallas_call(
        kernel,
        out_shape=(jax.ShapeDtypeStruct((N, H, W * C), dt),
                   jax.ShapeDtypeStruct((N, Hd, Wd * C), dt)),
        grid=(N // B,),
        in_specs=[
            pl.BlockSpec((B, H, W * C0), lambda n: (n, 0, 0)),       # x planar
            pl.BlockSpec((3, W * C0, W * C), lambda n: (0, 0, 0)),   # w1 (bf16)
            pl.BlockSpec((1, W * C), lambda n: (0, 0)),              # s1 (f32)
            pl.BlockSpec((1, W * C), lambda n: (0, 0)),              # b1
            pl.BlockSpec((3, W * C, W * C), lambda n: (0, 0, 0)),    # w2 (bf16)
            pl.BlockSpec((1, W * C), lambda n: (0, 0)),              # s2
            pl.BlockSpec((1, W * C), lambda n: (0, 0)),              # b2
            pl.BlockSpec((3, W * C, Wd * C), lambda n: (0, 0, 0)),   # w3 (bf16, s=2)
            pl.BlockSpec((1, Wd * C), lambda n: (0, 0)),             # s3
            pl.BlockSpec((1, Wd * C), lambda n: (0, 0)),             # b3
        ],
        out_specs=(
            pl.BlockSpec((B, H, W * C), lambda n: (n, 0, 0)),        # out
            pl.BlockSpec((B, Hd, Wd * C), lambda n: (n, 0, 0)),      # out_2
        ),
        scratch_shapes=[
            pltpu.VMEM((B * Hp, W * C0), jnp.float32),   # stacked stage-1 input
            pltpu.VMEM((B * Hp, W * C), jnp.float32),    # stacked stage-2/3 input
        ],
        compiler_params=pltpu.CompilerParams(
            dimension_semantics=("parallel",),
            vmem_limit_bytes=32 * 1024 * 1024),
    )(x_planar, w1, s1, b1, w2, s2, b2, w3, s3, b3)
    return out_p, out2_p


def fused_conv_stack(x_nchw, kparams, *, images_per_step=1):
    """NCHW convenience wrapper (layout conversion only at model boundaries)."""
    N, C0, H, W = x_nchw.shape
    x_planar = jnp.transpose(x_nchw, (0, 2, 3, 1)).reshape(N, H, W * C0)
    out_p, out2_p = fused_conv_stack_planar(
        x_planar, kparams, W, images_per_step=images_per_step)
    C = out_p.shape[-1] // W
    out = out_p.reshape(N, H, W, C).transpose(0, 3, 1, 2)
    out_2 = out2_p.reshape(N, H // 2, W // 2, C).transpose(0, 3, 1, 2)
    return out, out_2


# ---------------------------------------------------------------------------
# Host-side parameter preparation
# ---------------------------------------------------------------------------
def fold_bn(conv_bias, gamma, beta, mean, var, eps=1e-5):
    """Fold conv bias + inference BatchNorm into per-channel scale/bias."""
    scale = gamma / jnp.sqrt(var + eps)
    bias = (conv_bias - mean) * scale + beta
    return scale, bias


def make_row_weights(w, W, Wout, stride, dtype=jnp.bfloat16):
    """Fold the 3 dx taps, the width zero-padding (pad=1) and the W-stride of a
    3x3 conv into per-dy planar matmul weights:
        (3, 3, Cin, Cout) -> (3, W*Cin, Wout*Cout)    [no lane-side halo]
    Taps that fall off the image edge simply select nothing (== zero pad)."""
    _, _, Cin, Cout = w.shape
    dx = jnp.arange(3)[:, None, None]
    wi = jnp.arange(W)[None, :, None]
    wo = jnp.arange(Wout)[None, None, :]
    sel = (wi == stride * wo + dx - 1).astype(w.dtype)      # (3, W, Wout)
    wr = jnp.einsum('xio,yxcd->yicod', sel, w)              # (3, W, Cin, Wout, Cout)
    # Cast AFTER folding so the structural zeros are exact.
    return wr.reshape(3, W * Cin, Wout * Cout).astype(dtype)


def make_block_params(key, cin, cout):
    """Raw Conv3x3 + (inference-mode) BatchNorm parameters."""
    kw, kb, kg, kbe, km, kv = jax.random.split(key, 6)
    w = jax.random.normal(kw, (3, 3, cin, cout), jnp.float32) * 0.1
    b = jax.random.normal(kb, (cout,), jnp.float32) * 0.1
    gamma = 1.0 + 0.1 * jax.random.normal(kg, (cout,), jnp.float32)
    beta = 0.1 * jax.random.normal(kbe, (cout,), jnp.float32)
    mean = 0.1 * jax.random.normal(km, (cout,), jnp.float32)
    var = 0.5 + jnp.abs(jax.random.normal(kv, (cout,), jnp.float32))
    scale, bias = fold_bn(b, gamma, beta, mean, var)
    return dict(w=w, scale=scale, bias=bias)


def prepare_kernel_params(raw, W, stride):
    """Raw (w, scale, bias) -> (bf16 row-folded weight, planar f32 scale/bias)."""
    Wout = (W + 2 - 3) // stride + 1
    wr = make_row_weights(raw["w"], W, Wout, stride)
    s_p = jnp.tile(raw["scale"], Wout)[None, :].astype(jnp.float32)
    b_p = jnp.tile(raw["bias"], Wout)[None, :].astype(jnp.float32)
    return wr, s_p, b_p


# ---------------------------------------------------------------------------
# Self-test
# ---------------------------------------------------------------------------
def _reference_conv_bn_relu(x_nhwc, raw, stride):
    y = jax.lax.conv_general_dilated(
        x_nhwc, raw["w"], window_strides=(stride, stride),
        padding=((1, 1), (1, 1)),
        dimension_numbers=("NHWC", "HWIO", "NHWC"))
    y = y * raw["scale"].reshape(1, 1, 1, -1) + raw["bias"].reshape(1, 1, 1, -1)
    return jnp.maximum(y, 0.0)


if __name__ == "__main__":
    key = jax.random.PRNGKey(0)
    kx, k1, k2, k3 = jax.random.split(key, 4)

    # Small shapes; batch=4 so that with 2 images stacked per grid step the
    # grid still has 2 steps (keeps both v7x TensorCores busy).
    N, in_ch, out_ch, H, W = 4, 4, 8, 16, 16
    x = jax.random.normal(kx, (N, in_ch, H, W), jnp.float32)   # NCHW like PyTorch

    raw1 = make_block_params(k1, in_ch, out_ch)    # Conv-BN-ReLU #1 (s=1)
    raw2 = make_block_params(k2, out_ch, out_ch)   # Conv-BN-ReLU #2 (s=1)
    raw3 = make_block_params(k3, out_ch, out_ch)   # Conv-BN-ReLU    (s=2)

    kparams = (prepare_kernel_params(raw1, W, 1),
               prepare_kernel_params(raw2, W, 1),
               prepare_kernel_params(raw3, W, 2))

    out, out_2 = fused_conv_stack(x, kparams, images_per_step=2)
    jax.block_until_ready((out, out_2))

    assert out.shape == (N, out_ch, H, W), out.shape
    assert out_2.shape == (N, out_ch, H // 2, W // 2), out_2.shape

    # Pure-JAX reference (lax.conv on the raw, unfolded f32 weights).
    x_nhwc = jnp.transpose(x, (0, 2, 3, 1))
    r = _reference_conv_bn_relu(x_nhwc, raw1, 1)
    r = _reference_conv_bn_relu(r, raw2, 1)
    r2 = _reference_conv_bn_relu(r, raw3, 2)
    ref_out = jnp.transpose(r, (0, 3, 1, 2))
    ref_out_2 = jnp.transpose(r2, (0, 3, 1, 2))

    # bf16 MXU inputs -> looser tolerance than the pure-f32 version.
    assert jnp.allclose(out, ref_out, atol=5e-2, rtol=5e-2), \
        float(jnp.max(jnp.abs(out - ref_out)))
    assert jnp.allclose(out_2, ref_out_2, atol=5e-2, rtol=5e-2), \
        float(jnp.max(jnp.abs(out_2 - ref_out_2)))

    print("KERNEL_OK")
</pallas_src>

<mosaic_0001>
module attributes {stable_mosaic.version = 11 : i64} {
  func.func @_fused_kernel(%arg0: i32, %arg1: memref<2x16x64xf32, #tpu.memory_space<vmem>>, %arg2: memref<3x64x128xbf16, #tpu.memory_space<vmem>>, %arg3: memref<1x128xf32, #tpu.memory_space<vmem>>, %arg4: memref<1x128xf32, #tpu.memory_space<vmem>>, %arg5: memref<3x128x128xbf16, #tpu.memory_space<vmem>>, %arg6: memref<1x128xf32, #tpu.memory_space<vmem>>, %arg7: memref<1x128xf32, #tpu.memory_space<vmem>>, %arg8: memref<3x128x64xbf16, #tpu.memory_space<vmem>>, %arg9: memref<1x64xf32, #tpu.memory_space<vmem>>, %arg10: memref<1x64xf32, #tpu.memory_space<vmem>>, %arg11: memref<2x16x128xf32, #tpu.memory_space<vmem>>, %arg12: memref<2x8x64xf32, #tpu.memory_space<vmem>>, %arg13: memref<36x64xf32, #tpu.memory_space<vmem>>, %arg14: memref<36x128xf32, #tpu.memory_space<vmem>>) attributes {dimension_semantics = [#tpu.dimension_semantics<parallel>], iteration_bounds = array<i64: 2>, scalar_prefetch = 0 : i64, scratch_operands = 2 : i64, tpu.core_type = #tpu.core_type<tc>, window_params = [{transform_indices = @transform_0, window_bounds = array<i64: 2, 16, 64>}, {pipeline_mode = #tpu.pipeline_mode<synchronous>, transform_indices = @transform_1, window_bounds = array<i64: 3, 64, 128>}, {pipeline_mode = #tpu.pipeline_mode<synchronous>, transform_indices = @transform_2, window_bounds = array<i64: 1, 128>}, {pipeline_mode = #tpu.pipeline_mode<synchronous>, transform_indices = @transform_3, window_bounds = array<i64: 1, 128>}, {pipeline_mode = #tpu.pipeline_mode<synchronous>, transform_indices = @transform_4, window_bounds = array<i64: 3, 128, 128>}, {pipeline_mode = #tpu.pipeline_mode<synchronous>, transform_indices = @transform_5, window_bounds = array<i64: 1, 128>}, {pipeline_mode = #tpu.pipeline_mode<synchronous>, transform_indices = @transform_6, window_bounds = array<i64: 1, 128>}, {pipeline_mode = #tpu.pipeline_mode<synchronous>, transform_indices = @transform_7, window_bounds = array<i64: 3, 128, 64>}, {pipeline_mode = #tpu.pipeline_mode<synchronous>, transform_indices = @transform_8, window_bounds = array<i64: 1, 64>}, {pipeline_mode = #tpu.pipeline_mode<synchronous>, transform_indices = @transform_9, window_bounds = array<i64: 1, 64>}, {transform_indices = @transform_10, window_bounds = array<i64: 2, 16, 128>}, {transform_indices = @transform_11, window_bounds = array<i64: 2, 8, 64>}]} {
    %cst = arith.constant 0.000000e+00 : f32
    %0 = vector.broadcast %cst : f32 to vector<1x64xf32>
    %cst_0 = arith.constant 0.000000e+00 : f32
    %1 = vector.broadcast %cst_0 : f32 to vector<2x64xf32>
    %c0 = arith.constant 0 : index
    %c0_1 = arith.constant 0 : index
    %2 = vector.load %arg13[%c0, %c0_1] : memref<36x64xf32, #tpu.memory_space<vmem>>, vector<1x64xf32>
    tpu.vector_store %arg13[%c0, %c0_1], %0 {strides = array<i32>} : memref<36x64xf32, #tpu.memory_space<vmem>>, vector<1x64xf32>,
    %c35 = arith.constant 35 : index
    %c0_2 = arith.constant 0 : index
    %3 = vector.load %arg13[%c35, %c0_2] : memref<36x64xf32, #tpu.memory_space<vmem>>, vector<1x64xf32>
    tpu.vector_store %arg13[%c35, %c0_2], %0 {strides = array<i32>} : memref<36x64xf32, #tpu.memory_space<vmem>>, vector<1x64xf32>,
    %c17 = arith.constant 17 : index
    %c0_3 = arith.constant 0 : index
    %4 = vector.load %arg13[%c17, %c0_3] : memref<36x64xf32, #tpu.memory_space<vmem>>, vector<2x64xf32>
    tpu.vector_store %arg13[%c17, %c0_3], %1 {strides = array<i32>} : memref<36x64xf32, #tpu.memory_space<vmem>>, vector<2x64xf32>,
    %c0_4 = arith.constant 0 : index
    %c0_5 = arith.constant 0 : index
    %c0_6 = arith.constant 0 : index
    %5 = vector.load %arg1[%c0_4, %c0_5, %c0_6] : memref<2x16x64xf32, #tpu.memory_space<vmem>>, vector<1x16x64xf32>
    %6 = vector.shape_cast %5 : vector<1x16x64xf32> to vector<16x64xf32>
    %c1 = arith.constant 1 : index
    %c0_7 = arith.constant 0 : index
    %7 = vector.load %arg13[%c1, %c0_7] : memref<36x64xf32, #tpu.memory_space<vmem>>, vector<16x64xf32>
    tpu.vector_store %arg13[%c1, %c0_7], %6 {strides = array<i32>} : memref<36x64xf32, #tpu.memory_space<vmem>>, vector<16x64xf32>,
    %c1_8 = arith.constant 1 : index
    %c0_9 = arith.constant 0 : index
    %c0_10 = arith.constant 0 : index
    %8 = vector.load %arg1[%c1_8, %c0_9, %c0_10] : memref<2x16x64xf32, #tpu.memory_space<vmem>>, vector<1x16x64xf32>
    %9 = vector.shape_cast %8 : vector<1x16x64xf32> to vector<16x64xf32>
    %c19 = arith.constant 19 : index
    %c0_11 = arith.constant 0 : index
    %10 = vector.load %arg13[%c19, %c0_11] : memref<36x64xf32, #tpu.memory_space<vmem>>, vector<16x64xf32>
    tpu.vector_store %arg13[%c19, %c0_11], %9 {strides = array<i32>} : memref<36x64xf32, #tpu.memory_space<vmem>>, vector<16x64xf32>,
    %c0_12 = arith.constant 0 : index
    %c0_13 = arith.constant 0 : index
    %11 = vector.load %arg13[%c0_12, %c0_13] : memref<36x64xf32, #tpu.memory_space<vmem>>, vector<34x64xf32>
    %12 = arith.truncf %11 : vector<34x64xf32> to vector<34x64xbf16>
    %c0_14 = arith.constant 0 : index
    %c0_15 = arith.constant 0 : index
    %c0_16 = arith.constant 0 : index
    %13 = vector.load %arg2[%c0_14, %c0_15, %c0_16] : memref<3x64x128xbf16, #tpu.memory_space<vmem>>, vector<1x64x128xbf16>
    %14 = vector.shape_cast %13 : vector<1x64x128xbf16> to vector<64x128xbf16>
    %cst_17 = arith.constant dense<0.000000e+00> : vector<34x128xf32>
    %15 = tpu.matmul %12, %14, %cst_17 {dimension_numbers = #tpu.dot_dimension_numbers<[1], [0], [0], [1], [0, 0, 1, 1], [], []>} : vector<34x64xbf16>, vector<64x128xbf16>, vector<34x128xf32> -> vector<34x128xf32>
    %c1_18 = arith.constant 1 : index
    %c0_19 = arith.constant 0 : index
    %16 = vector.load %arg13[%c1_18, %c0_19] : memref<36x64xf32, #tpu.memory_space<vmem>>, vector<34x64xf32>
    %17 = arith.truncf %16 : vector<34x64xf32> to vector<34x64xbf16>
    %c1_20 = arith.constant 1 : index
    %c0_21 = arith.constant 0 : index
    %c0_22 = arith.constant 0 : index
    %18 = vector.load %arg2[%c1_20, %c0_21, %c0_22] : memref<3x64x128xbf16, #tpu.memory_space<vmem>>, vector<1x64x128xbf16>
    %19 = vector.shape_cast %18 : vector<1x64x128xbf16> to vector<64x128xbf16>
    %cst_23 = arith.constant dense<0.000000e+00> : vector<34x128xf32>
    %20 = tpu.matmul %17, %19, %cst_23 {dimension_numbers = #tpu.dot_dimension_numbers<[1], [0], [0], [1], [0, 0, 1, 1], [], []>} : vector<34x64xbf16>, vector<64x128xbf16>, vector<34x128xf32> -> vector<34x128xf32>
    %21 = arith.addf %15, %20 : vector<34x128xf32>
    %c2 = arith.constant 2 : index
    %c0_24 = arith.constant 0 : index
    %22 = vector.load %arg13[%c2, %c0_24] : memref<36x64xf32, #tpu.memory_space<vmem>>, vector<34x64xf32>
    %23 = arith.truncf %22 : vector<34x64xf32> to vector<34x64xbf16>
    %c2_25 = arith.constant 2 : index
    %c0_26 = arith.constant 0 : index
    %c0_27 = arith.constant 0 : index
    %24 = vector.load %arg2[%c2_25, %c0_26, %c0_27] : memref<3x64x128xbf16, #tpu.memory_space<vmem>>, vector<1x64x128xbf16>
    %25 = vector.shape_cast %24 : vector<1x64x128xbf16> to vector<64x128xbf16>
    %cst_28 = arith.constant dense<0.000000e+00> : vector<34x128xf32>
    %26 = tpu.matmul %23, %25, %cst_28 {dimension_numbers = #tpu.dot_dimension_numbers<[1], [0], [0], [1], [0, 0, 1, 1], [], []>} : vector<34x64xbf16>, vector<64x128xbf16>, vector<34x128xf32> -> vector<34x128xf32>
    %27 = arith.addf %21, %26 : vector<34x128xf32>
    %c0_29 = arith.constant 0 : index
    %c0_30 = arith.constant 0 : index
    %28 = vector.load %arg3[%c0_29, %c0_30] : memref<1x128xf32, #tpu.memory_space<vmem>>, vector<1x128xf32>
    %29 = vector.broadcast %28 : vector<1x128xf32> to vector<34x128xf32>
    %30 = arith.mulf %27, %29 : vector<34x128xf32>
    %c0_31 = arith.constant 0 : index
    %c0_32 = arith.constant 0 : index
    %31 = vector.load %arg4[%c0_31, %c0_32] : memref<1x128xf32, #tpu.memory_space<vmem>>, vector<1x128xf32>
    %32 = vector.broadcast %31 : vector<1x128xf32> to vector<34x128xf32>
    %33 = arith.addf %30, %32 : vector<34x128xf32>
    %cst_33 = arith.constant 0.000000e+00 : f32
    %34 = vector.broadcast %cst_33 : f32 to vector<34x128xf32>
    %35 = arith.maximumf %33, %34 : vector<34x128xf32>
    %c1_34 = arith.constant 1 : index
    %c0_35 = arith.constant 0 : index
    %36 = vector.load %arg14[%c1_34, %c0_35] : memref<36x128xf32, #tpu.memory_space<vmem>>, vector<34x128xf32>
    tpu.vector_store %arg14[%c1_34, %c0_35], %35 {strides = array<i32>} : memref<36x128xf32, #tpu.memory_space<vmem>>, vector<34x128xf32>,
    %cst_36 = arith.constant 0.000000e+00 : f32
    %37 = vector.broadcast %cst_36 : f32 to vector<1x128xf32>
    %cst_37 = arith.constant 0.000000e+00 : f32
    %38 = vector.broadcast %cst_37 : f32 to vector<2x128xf32>
    %c0_38 = arith.constant 0 : index
    %c0_39 = arith.constant 0 : index
    %39 = vector.load %arg14[%c0_38, %c0_39] : memref<36x128xf32, #tpu.memory_space<vmem>>, vector<1x128xf32>
    tpu.vector_store %arg14[%c0_38, %c0_39], %37 {strides = array<i32>} : memref<36x128xf32, #tpu.memory_space<vmem>>, vector<1x128xf32>,
    %c35_40 = arith.constant 35 : index
    %c0_41 = arith.constant 0 : index
    %40 = vector.load %arg14[%c35_40, %c0_41] : memref<36x128xf32, #tpu.memory_space<vmem>>, vector<1x128xf32>
    tpu.vector_store %arg14[%c35_40, %c0_41], %37 {strides = array<i32>} : memref<36x128xf32, #tpu.memory_space<vmem>>, vector<1x128xf32>,
    %c17_42 = arith.constant 17 : index
    %c0_43 = arith.constant 0 : index
    %41 = vector.load %arg14[%c17_42, %c0_43] : memref<36x128xf32, #tpu.memory_space<vmem>>, vector<2x128xf32>
    tpu.vector_store %arg14[%c17_42, %c0_43], %38 {strides = array<i32>} : memref<36x128xf32, #tpu.memory_space<vmem>>, vector<2x128xf32>,
    %c0_44 = arith.constant 0 : index
    %c0_45 = arith.constant 0 : index
    %42 = vector.load %arg14[%c0_44, %c0_45] : memref<36x128xf32, #tpu.memory_space<vmem>>, vector<34x128xf32>
    %43 = arith.truncf %42 : vector<34x128xf32> to vector<34x128xbf16>
    %c0_46 = arith.constant 0 : index
    %c0_47 = arith.constant 0 : index
    %c0_48 = arith.constant 0 : index
    %44 = vector.load %arg5[%c0_46, %c0_47, %c0_48] : memref<3x128x128xbf16, #tpu.memory_space<vmem>>, vector<1x128x128xbf16>
    %45 = vector.shape_cast %44 : vector<1x128x128xbf16> to vector<128x128xbf16>
    %cst_49 = arith.constant dense<0.000000e+00> : vector<34x128xf32>
    %46 = tpu.matmul %43, %45, %cst_49 {dimension_numbers = #tpu.dot_dimension_numbers<[1], [0], [0], [1], [0, 0, 1, 1], [], []>} : vector<34x128xbf16>, vector<128x128xbf16>, vector<34x128xf32> -> vector<34x128xf32>
    %c1_50 = arith.constant 1 : index
    %c0_51 = arith.constant 0 : index
    %47 = vector.load %arg14[%c1_50, %c0_51] : memref<36x128xf32, #tpu.memory_space<vmem>>, vector<34x128xf32>
    %48 = arith.truncf %47 : vector<34x128xf32> to vector<34x128xbf16>
    %c1_52 = arith.constant 1 : index
    %c0_53 = arith.constant 0 : index
    %c0_54 = arith.constant 0 : index
    %49 = vector.load %arg5[%c1_52, %c0_53, %c0_54] : memref<3x128x128xbf16, #tpu.memory_space<vmem>>, vector<1x128x128xbf16>
    %50 = vector.shape_cast %49 : vector<1x128x128xbf16> to vector<128x128xbf16>
    %cst_55 = arith.constant dense<0.000000e+00> : vector<34x128xf32>
    %51 = tpu.matmul %48, %50, %cst_55 {dimension_numbers = #tpu.dot_dimension_numbers<[1], [0], [0], [1], [0, 0, 1, 1], [], []>} : vector<34x128xbf16>, vector<128x128xbf16>, vector<34x128xf32> -> vector<34x128xf32>
    %52 = arith.addf %46, %51 : vector<34x128xf32>
    %c2_56 = arith.constant 2 : index
    %c0_57 = arith.constant 0 : index
    %53 = vector.load %arg14[%c2_56, %c0_57] : memref<36x128xf32, #tpu.memory_space<vmem>>, vector<34x128xf32>
    %54 = arith.truncf %53 : vector<34x128xf32> to vector<34x128xbf16>
    %c2_58 = arith.constant 2 : index
    %c0_59 = arith.constant 0 : index
    %c0_60 = arith.constant 0 : index
    %55 = vector.load %arg5[%c2_58, %c0_59, %c0_60] : memref<3x128x128xbf16, #tpu.memory_space<vmem>>, vector<1x128x128xbf16>
    %56 = vector.shape_cast %55 : vector<1x128x128xbf16> to vector<128x128xbf16>
    %cst_61 = arith.constant dense<0.000000e+00> : vector<34x128xf32>
    %57 = tpu.matmul %54, %56, %cst_61 {dimension_numbers = #tpu.dot_dimension_numbers<[1], [0], [0], [1], [0, 0, 1, 1], [], []>} : vector<34x128xbf16>, vector<128x128xbf16>, vector<34x128xf32> -> vector<34x128xf32>
    %58 = arith.addf %52, %57 : vector<34x128xf32>
    %c0_62 = arith.constant 0 : index
    %c0_63 = arith.constant 0 : index
    %59 = vector.load %arg6[%c0_62, %c0_63] : memref<1x128xf32, #tpu.memory_space<vmem>>, vector<1x128xf32>
    %60 = vector.broadcast %59 : vector<1x128xf32> to vector<34x128xf32>
    %61 = arith.mulf %58, %60 : vector<34x128xf32>
    %c0_64 = arith.constant 0 : index
    %c0_65 = arith.constant 0 : index
    %62 = vector.load %arg7[%c0_64, %c0_65] : memref<1x128xf32, #tpu.memory_space<vmem>>, vector<1x128xf32>
    %63 = vector.broadcast %62 : vector<1x128xf32> to vector<34x128xf32>
    %64 = arith.addf %61, %63 : vector<34x128xf32>
    %cst_66 = arith.constant 0.000000e+00 : f32
    %65 = vector.broadcast %cst_66 : f32 to vector<34x128xf32>
    %66 = arith.maximumf %64, %65 : vector<34x128xf32>
    %67 = vector.extract_strided_slice %66 {offsets = [0, 0], sizes = [16, 128], strides = [1, 1]} : vector<34x128xf32> to vector<16x128xf32>
    %c0_67 = arith.constant 0 : index
    %c0_68 = arith.constant 0 : index
    %c0_69 = arith.constant 0 : index
    %68 = vector.load %arg11[%c0_67, %c0_68, %c0_69] : memref<2x16x128xf32, #tpu.memory_space<vmem>>, vector<1x16x128xf32>
    %69 = vector.shape_cast %68 : vector<1x16x128xf32> to vector<16x128xf32>
    %70 = vector.shape_cast %67 : vector<16x128xf32> to vector<1x16x128xf32>
    tpu.vector_store %arg11[%c0_67, %c0_68, %c0_69], %70 {strides = array<i32>} : memref<2x16x128xf32, #tpu.memory_space<vmem>>, vector<1x16x128xf32>,
    %71 = vector.extract_strided_slice %66 {offsets = [18, 0], sizes = [16, 128], strides = [1, 1]} : vector<34x128xf32> to vector<16x128xf32>
    %c1_70 = arith.constant 1 : index
    %c0_71 = arith.constant 0 : index
    %c0_72 = arith.constant 0 : index
    %72 = vector.load %arg11[%c1_70, %c0_71, %c0_72] : memref<2x16x128xf32, #tpu.memory_space<vmem>>, vector<1x16x128xf32>
    %73 = vector.shape_cast %72 : vector<1x16x128xf32> to vector<16x128xf32>
    %74 = vector.shape_cast %71 : vector<16x128xf32> to vector<1x16x128xf32>
    tpu.vector_store %arg11[%c1_70, %c0_71, %c0_72], %74 {strides = array<i32>} : memref<2x16x128xf32, #tpu.memory_space<vmem>>, vector<1x16x128xf32>,
    %c1_73 = arith.constant 1 : index
    %c0_74 = arith.constant 0 : index
    %75 = vector.load %arg14[%c1_73, %c0_74] : memref<36x128xf32, #tpu.memory_space<vmem>>, vector<34x128xf32>
    tpu.vector_store %arg14[%c1_73, %c0_74], %66 {strides = array<i32>} : memref<36x128xf32, #tpu.memory_space<vmem>>, vector<34x128xf32>,
    %cst_75 = arith.constant 0.000000e+00 : f32
    %76 = vector.broadcast %cst_75 : f32 to vector<1x128xf32>
    %cst_76 = arith.constant 0.000000e+00 : f32
    %77 = vector.broadcast %cst_76 : f32 to vector<2x128xf32>
    %c0_77 = arith.constant 0 : index
    %c0_78 = arith.constant 0 : index
    %78 = vector.load %arg14[%c0_77, %c0_78] : memref<36x128xf32, #tpu.memory_space<vmem>>, vector<1x128xf32>
    tpu.vector_store %arg14[%c0_77, %c0_78], %76 {strides = array<i32>} : memref<36x128xf32, #tpu.memory_space<vmem>>, vector<1x128xf32>,
    %c35_79 = arith.constant 35 : index
    %c0_80 = arith.constant 0 : index
    %79 = vector.load %arg14[%c35_79, %c0_80] : memref<36x128xf32, #tpu.memory_space<vmem>>, vector<1x128xf32>
    tpu.vector_store %arg14[%c35_79, %c0_80], %76 {strides = array<i32>} : memref<36x128xf32, #tpu.memory_space<vmem>>, vector<1x128xf32>,
    %c17_81 = arith.constant 17 : index
    %c0_82 = arith.constant 0 : index
    %80 = vector.load %arg14[%c17_81, %c0_82] : memref<36x128xf32, #tpu.memory_space<vmem>>, vector<2x128xf32>
    tpu.vector_store %arg14[%c17_81, %c0_82], %77 {strides = array<i32>} : memref<36x128xf32, #tpu.memory_space<vmem>>, vector<2x128xf32>,
    %c0_83 = arith.constant 0 : index
    %c0_84 = arith.constant 0 : index
    %81 = tpu.strided_load %arg14[%c0_83, %c0_84] {strides = array<i32: 2, 1>} : memref<36x128xf32, #tpu.memory_space<vmem>>, vector<17x128xf32>
    %82 = arith.truncf %81 : vector<17x128xf32> to vector<17x128xbf16>
    %c0_85 = arith.constant 0 : index
    %c0_86 = arith.constant 0 : index
    %c0_87 = arith.constant 0 : index
    %83 = vector.load %arg8[%c0_85, %c0_86, %c0_87] : memref<3x128x64xbf16, #tpu.memory_space<vmem>>, vector<1x128x64xbf16>
    %84 = vector.shape_cast %83 : vector<1x128x64xbf16> to vector<128x64xbf16>
    %cst_88 = arith.constant dense<0.000000e+00> : vector<17x64xf32>
    %85 = tpu.matmul %82, %84, %cst_88 {dimension_numbers = #tpu.dot_dimension_numbers<[1], [0], [0], [1], [0, 0, 1, 1], [], []>} : vector<17x128xbf16>, vector<128x64xbf16>, vector<17x64xf32> -> vector<17x64xf32>
    %c1_89 = arith.constant 1 : index
    %c0_90 = arith.constant 0 : index
    %86 = tpu.strided_load %arg14[%c1_89, %c0_90] {strides = array<i32: 2, 1>} : memref<36x128xf32, #tpu.memory_space<vmem>>, vector<17x128xf32>
    %87 = arith.truncf %86 : vector<17x128xf32> to vector<17x128xbf16>
    %c1_91 = arith.constant 1 : index
    %c0_92 = arith.constant 0 : index
    %c0_93 = arith.constant 0 : index
    %88 = vector.load %arg8[%c1_91, %c0_92, %c0_93] : memref<3x128x64xbf16, #tpu.memory_space<vmem>>, vector<1x128x64xbf16>
    %89 = vector.shape_cast %88 : vector<1x128x64xbf16> to vector<128x64xbf16>
    %cst_94 = arith.constant dense<0.000000e+00> : vector<17x64xf32>
    %90 = tpu.matmul %87, %89, %cst_94 {dimension_numbers = #tpu.dot_dimension_numbers<[1], [0], [0], [1], [0, 0, 1, 1], [], []>} : vector<17x128xbf16>, vector<128x64xbf16>, vector<17x64xf32> -> vector<17x64xf32>
    %91 = arith.addf %85, %90 : vector<17x64xf32>
    %c2_95 = arith.constant 2 : index
    %c0_96 = arith.constant 0 : index
    %92 = tpu.strided_load %arg14[%c2_95, %c0_96] {strides = array<i32: 2, 1>} : memref<36x128xf32, #tpu.memory_space<vmem>>, vector<17x128xf32>
    %93 = arith.truncf %92 : vector<17x128xf32> to vector<17x128xbf16>
    %c2_97 = arith.constant 2 : index
    %c0_98 = arith.constant 0 : index
    %c0_99 = arith.constant 0 : index
    %94 = vector.load %arg8[%c2_97, %c0_98, %c0_99] : memref<3x128x64xbf16, #tpu.memory_space<vmem>>, vector<1x128x64xbf16>
    %95 = vector.shape_cast %94 : vector<1x128x64xbf16> to vector<128x64xbf16>
    %cst_100 = arith.constant dense<0.000000e+00> : vector<17x64xf32>
    %96 = tpu.matmul %93, %95, %cst_100 {dimension_numbers = #tpu.dot_dimension_numbers<[1], [0], [0], [1], [0, 0, 1, 1], [], []>} : vector<17x128xbf16>, vector<128x64xbf16>, vector<17x64xf32> -> vector<17x64xf32>
    %97 = arith.addf %91, %96 : vector<17x64xf32>
    %c0_101 = arith.constant 0 : index
    %c0_102 = arith.constant 0 : index
    %98 = vector.load %arg9[%c0_101, %c0_102] : memref<1x64xf32, #tpu.memory_space<vmem>>, vector<1x64xf32>
    %99 = vector.broadcast %98 : vector<1x64xf32> to vector<17x64xf32>
    %100 = arith.mulf %97, %99 : vector<17x64xf32>
    %c0_103 = arith.constant 0 : index
    %c0_104 = arith.constant 0 : index
    %101 = vector.load %arg10[%c0_103, %c0_104] : memref<1x64xf32, #tpu.memory_space<vmem>>, vector<1x64xf32>
    %102 = vector.broadcast %101 : vector<1x64xf32> to vector<17x64xf32>
    %103 = arith.addf %100, %102 : vector<17x64xf32>
    %cst_105 = arith.constant 0.000000e+00 : f32
    %104 = vector.broadcast %cst_105 : f32 to vector<17x64xf32>
    %105 = arith.maximumf %103, %104 : vector<17x64xf32>
    %106 = vector.extract_strided_slice %105 {offsets = [0, 0], sizes = [8, 64], strides = [1, 1]} : vector<17x64xf32> to vector<8x64xf32>
    %c0_106 = arith.constant 0 : index
    %c0_107 = arith.constant 0 : index
    %c0_108 = arith.constant 0 : index
    %107 = vector.load %arg12[%c0_106, %c0_107, %c0_108] : memref<2x8x64xf32, #tpu.memory_space<vmem>>, vector<1x8x64xf32>
    %108 = vector.shape_cast %107 : vector<1x8x64xf32> to vector<8x64xf32>
    %109 = vector.shape_cast %106 : vector<8x64xf32> to vector<1x8x64xf32>
    tpu.vector_store %arg12[%c0_106, %c0_107, %c0_108], %109 {strides = array<i32>} : memref<2x8x64xf32, #tpu.memory_space<vmem>>, vector<1x8x64xf32>,
    %110 = vector.extract_strided_slice %105 {offsets = [9, 0], sizes = [8, 64], strides = [1, 1]} : vector<17x64xf32> to vector<8x64xf32>
    %c1_109 = arith.constant 1 : index
    %c0_110 = arith.constant 0 : index
    %c0_111 = arith.constant 0 : index
    %111 = vector.load %arg12[%c1_109, %c0_110, %c0_111] : memref<2x8x64xf32, #tpu.memory_space<vmem>>, vector<1x8x64xf32>
    %112 = vector.shape_cast %111 : vector<1x8x64xf32> to vector<8x64xf32>
    %113 = vector.shape_cast %110 : vector<8x64xf32> to vector<1x8x64xf32>
    tpu.vector_store %arg12[%c1_109, %c0_110, %c0_111], %113 {strides = array<i32>} : memref<2x8x64xf32, #tpu.memory_space<vmem>>, vector<1x8x64xf32>,
    return
  }
  func.func @transform_0(%arg0: i32) -> (i32, i32, i32) {
    %c0_i32 = arith.constant 0 : i32
    %c0_i32_0 = arith.constant 0 : i32
    %c0_i32_1 = arith.constant 0 : i32
    return %arg0, %c0_i32, %c0_i32_0 : i32, i32, i32
  }
  func.func @transform_1(%arg0: i32) -> (i32, i32, i32) {
    %c0_i32 = arith.constant 0 : i32
    %c0_i32_0 = arith.constant 0 : i32
    %c0_i32_1 = arith.constant 0 : i32
    %c0_i32_2 = arith.constant 0 : i32
    return %c0_i32, %c0_i32_0, %c0_i32_1 : i32, i32, i32
  }
  func.func @transform_2(%arg0: i32) -> (i32, i32) {
    %c0_i32 = arith.constant 0 : i32
    %c0_i32_0 = arith.constant 0 : i32
    %c0_i32_1 = arith.constant 0 : i32
    return %c0_i32, %c0_i32_0 : i32, i32
  }
  func.func @transform_3(%arg0: i32) -> (i32, i32) {
    %c0_i32 = arith.constant 0 : i32
    %c0_i32_0 = arith.constant 0 : i32
    %c0_i32_1 = arith.constant 0 : i32
    return %c0_i32, %c0_i32_0 : i32, i32
  }
  func.func @transform_4(%arg0: i32) -> (i32, i32, i32) {
    %c0_i32 = arith.constant 0 : i32
    %c0_i32_0 = arith.constant 0 : i32
    %c0_i32_1 = arith.constant 0 : i32
    %c0_i32_2 = arith.constant 0 : i32
    return %c0_i32, %c0_i32_0, %c0_i32_1 : i32, i32, i32
  }
  func.func @transform_5(%arg0: i32) -> (i32, i32) {
    %c0_i32 = arith.constant 0 : i32
    %c0_i32_0 = arith.constant 0 : i32
    %c0_i32_1 = arith.constant 0 : i32
    return %c0_i32, %c0_i32_0 : i32, i32
  }
  func.func @transform_6(%arg0: i32) -> (i32, i32) {
    %c0_i32 = arith.constant 0 : i32
    %c0_i32_0 = arith.constant 0 : i32
    %c0_i32_1 = arith.constant 0 : i32
    return %c0_i32, %c0_i32_0 : i32, i32
  }
  func.func @transform_7(%arg0: i32) -> (i32, i32, i32) {
    %c0_i32 = arith.constant 0 : i32
    %c0_i32_0 = arith.constant 0 : i32
    %c0_i32_1 = arith.constant 0 : i32
    %c0_i32_2 = arith.constant 0 : i32
    return %c0_i32, %c0_i32_0, %c0_i32_1 : i32, i32, i32
  }
  func.func @transform_8(%arg0: i32) -> (i32, i32) {
    %c0_i32 = arith.constant 0 : i32
    %c0_i32_0 = arith.constant 0 : i32
    %c0_i32_1 = arith.constant 0 : i32
    return %c0_i32, %c0_i32_0 : i32, i32
  }
  func.func @transform_9(%arg0: i32) -> (i32, i32) {
    %c0_i32 = arith.constant 0 : i32
    %c0_i32_0 = arith.constant 0 : i32
    %c0_i32_1 = arith.constant 0 : i32
    return %c0_i32, %c0_i32_0 : i32, i32
  }
  func.func @transform_10(%arg0: i32) -> (i32, i32, i32) {
    %c0_i32 = arith.constant 0 : i32
    %c0_i32_0 = arith.constant 0 : i32
    %c0_i32_1 = arith.constant 0 : i32
    return %arg0, %c0_i32, %c0_i32_0 : i32, i32, i32
  }
  func.func @transform_11(%arg0: i32) -> (i32, i32, i32) {
    %c0_i32 = arith.constant 0 : i32
    %c0_i32_0 = arith.constant 0 : i32
    %c0_i32_1 = arith.constant 0 : i32
    return %arg0, %c0_i32, %c0_i32_0 : i32, i32, i32
  }
}

</mosaic_0001>

<llo_original>
// kernel: tpu_custom_call.1
$region0: #{tpu_custom_call.1}
  #allocation0 [shape = 'u32[]', space=smem, size = 0x4, offset = 0x4, fixed_abs, tag = 'smem constant byte address 0x4 - core index']
  #allocation1 [shape = 'u32[144,128]{1,0:T(1,128)}', space=vmem, size = 0x12000, scoped, tag = 'internal scratch']
  #allocation2 [shape = 'f32[36,64]{1,0:T(8,128)}', space=vmem, size = 0x5000, scoped, tag = 'scratch operand']
  #allocation3 [shape = 'f32[36,128]{1,0:T(8,128)}', space=vmem, size = 0x5000, scoped, tag = 'scratch operand']
  %s0 = inlined_call_operand.hbm [shape: f32[4,16,64], index: 0, kind: input, shape index: {}]
  %s1 = inlined_call_operand.vmem [shape: bf16[3,64,128], index: 1, kind: input, shape index: {}]
  %s2 = inlined_call_operand.vmem [shape: f32[1,128], index: 2, kind: input, shape index: {}]
  %s3 = inlined_call_operand.vmem [shape: f32[1,128], index: 3, kind: input, shape index: {}]
  %s4 = inlined_call_operand.vmem [shape: bf16[3,128,128], index: 4, kind: input, shape index: {}]
  %s5 = inlined_call_operand.vmem [shape: f32[1,128], index: 5, kind: input, shape index: {}]
  %s6 = inlined_call_operand.vmem [shape: f32[1,128], index: 6, kind: input, shape index: {}]
  %s7 = inlined_call_operand.vmem [shape: bf16[3,128,64], index: 7, kind: input, shape index: {}]
  %s8 = inlined_call_operand.vmem [shape: f32[1,64], index: 8, kind: input, shape index: {}]
  %s9 = inlined_call_operand.vmem [shape: f32[1,64], index: 9, kind: input, shape index: {}]
  %s10 = inlined_call_operand.hbm [shape: f32[4,16,128], index: 10, kind: output, shape index: {0}]
  %s11 = inlined_call_operand.hbm [shape: f32[4,8,64], index: 11, kind: output, shape index: {1}]
  %12 = xla_tuple %s10, %s11
  %s13 = sld [smem:[#allocation0]]
  $region85: #{tpu_custom_call.1} parent=0
    _
  %s15 = ssub.s32 1, %s13
  %s16 = scalar_select 0, %s15, %s13
  $region1: #{tpu_custom_call.1} parent=0
    #allocation4 [shape = 'u8[32768]{0}', space=vmem, size = 0x8000, scoped, tag = 'input window, operand 0']
    #allocation5 [shape = 's32[2]{0}', space=sflag, size = 0x8, scoped, tag = 'scoped memory for tpu_custom_call.1']
    #allocation6 [shape = 's32[2]{0}', space=sflag, size = 0x8, scoped, tag = 'scoped memory for tpu_custom_call.1']
    #allocation7 [shape = 'u8[32768]{0}', space=vmem, size = 0x8000, scoped, tag = 'output window, operand 0']
    #allocation8 [shape = 'u8[16384]{0}', space=vmem, size = 0x4000, scoped, tag = 'output window, operand 1']
    #allocation9 [shape = 's32[2]{0}', space=sflag, size = 0x8, scoped, tag = 'scoped memory for tpu_custom_call.1']
    %17 = vsyncpa [#allocation5], 0
    %s18 = scalar_lea.sflag [#allocation5], 1
    %19 = vsyncpa %s18, 0
    %20 = vsyncpa [#allocation6], 0
    %s21 = scalar_lea.sflag [#allocation6], 1
    %22 = vsyncpa %s21, 0
    %23 = vsyncpa [#allocation9], 0
    %s24 = scalar_lea.sflag [#allocation9], 1
    %25 = vsyncpa %s24, 0
    loop: start=0, step=1, limit=4
    $region2: #{tpu_custom_call.1} parent=1 // loop_pre_header
      _
    $region3: #{tpu_custom_call.1} parent=1 // loop_header
      %s27 = sphi 0, %s31
      %p28 = scmp.ge.s32.totalorder %s27, 4
      %s37 = sphi 0, %s39
      %s40 = sphi 0, %s37
      %s41 = sphi 0, %s40
      %s57 = sphi 0, %s41
      %s61 = sphi 0, %s61
      %s63 = sphi 0, %s61
      %s64 = sphi 0, %s63
      %s78 = sphi 0, %s64
      %s82 = sphi 0, %s82
      %s84 = sphi 0, %s82
      %s85 = sphi 0, %s84
      %s99 = sphi 0, %s85
      %s103 = sphi 0, %s103
      %s105 = sphi 0, %s103
      %s106 = sphi 0, %s105
      %s120 = sphi 0, %s106
      %s124 = sphi 0, %s124
      %s126 = sphi 0, %s124
      %s127 = sphi 0, %s126
      %s141 = sphi 0, %s127
      %s145 = sphi 0, %s145
      %s147 = sphi 0, %s145
      %s148 = sphi 0, %s147
      %s162 = sphi 0, %s148
      %s166 = sphi 0, %s166
      %s168 = sphi 0, %s166
      %s169 = sphi 0, %s168
      %s183 = sphi 0, %s169
      %s187 = sphi 0, %s187
      %s189 = sphi 0, %s187
      %s190 = sphi 0, %s189
      %s204 = sphi 0, %s190
      %s208 = sphi 0, %s208
      %s210 = sphi 0, %s208
      %s211 = sphi 0, %s210
      %s225 = sphi 0, %s211
      %s229 = sphi 0, %s229
      %s231 = sphi 0, %s229
      %s232 = sphi 0, %s231
      %s246 = sphi 0, %s232
      %s252 = sphi 0, %s254
      %s255 = sphi 0, %s252
      %s256 = sphi 0, %s255
      %s272 = sphi 0, %s256
      %s278 = sphi 0, %s280
      %s281 = sphi 0, %s278
      %s282 = sphi 0, %s281
      %s298 = sphi 0, %s282
    $region4: #{tpu_custom_call.1} parent=1 // loop_header_branch
      %30 = sbr.rel (%p28) target = $region8
    $region5: #{tpu_custom_call.1} parent=1 // loop_body
      %s32 = ssub.s32 %s27, 1
      %s33 = ssub.s32 %s27, 2
      %s34 = sadd.s32 %s27, 1
      %s35 = ssub.s32 %s27, %s34
      %p36 = scmp.eq.s32.totalorder %s35, 0
      %s38 = sadd.s32 %s37, 1
      %s39 = scalar_select %p36, %s37, %s38
      %p42 = pneg %p36
      %p43 = scmp.eq.s32.totalorder %s27, 1
      %p44 = por %p42, %p43
      %p45 = scmp.ne.s32.totalorder %s37, %s40
      %p46 = scmp.eq.s32.totalorder %s27, 0
      %p47 = por %p45, %p46
      %p48 = scmp.ne.s32.totalorder %s37, %s40
      %p49 = scmp.eq.s32.totalorder %s32, 1
      %p50 = por %p48, %p49
      %p51 = scmp.ne.s32.totalorder %s40, %s41
      %p52 = scmp.eq.s32.totalorder %s32, 0
      %p53 = por %p51, %p52
      %p54 = scmp.ne.s32.totalorder %s40, %s41
      %p55 = scmp.eq.s32.totalorder %s33, 1
      %p56 = por %p54, %p55
      %p58 = scmp.ne.s32.totalorder %s41, %s57
      %p59 = scmp.eq.s32.totalorder %s33, 0
      %p60 = por %p58, %p59
      %s62 = sadd.s32 %s61, 1
      %p65 = scmp.eq.s32.totalorder %s27, 1
      %p66 = scmp.ne.s32.totalorder %s61, %s63
      %p67 = scmp.eq.s32.totalorder %s27, 0
      %p68 = por %p66, %p67
      %p69 = scmp.ne.s32.totalorder %s61, %s63
      %p70 = scmp.eq.s32.totalorder %s32, 1
      %p71 = por %p69, %p70
      %p72 = scmp.ne.s32.totalorder %s63, %s64
      %p73 = scmp.eq.s32.totalorder %s32, 0
      %p74 = por %p72, %p73
      %p75 = scmp.ne.s32.totalorder %s63, %s64
      %p76 = scmp.eq.s32.totalorder %s33, 1
      %p77 = por %p75, %p76
      %p79 = scmp.ne.s32.totalorder %s64, %s78
      %p80 = scmp.eq.s32.totalorder %s33, 0
      %p81 = por %p79, %p80
      %s83 = sadd.s32 %s82, 1
      %p86 = scmp.eq.s32.totalorder %s27, 1
      %p87 = scmp.ne.s32.totalorder %s82, %s84
      %p88 = scmp.eq.s32.totalorder %s27, 0
      %p89 = por %p87, %p88
      %p90 = scmp.ne.s32.totalorder %s82, %s84
      %p91 = scmp.eq.s32.totalorder %s32, 1
      %p92 = por %p90, %p91
      %p93 = scmp.ne.s32.totalorder %s84, %s85
      %p94 = scmp.eq.s32.totalorder %s32, 0
      %p95 = por %p93, %p94
      %p96 = scmp.ne.s32.totalorder %s84, %s85
      %p97 = scmp.eq.s32.totalorder %s33, 1
      %p98 = por %p96, %p97
      %p100 = scmp.ne.s32.totalorder %s85, %s99
      %p101 = scmp.eq.s32.totalorder %s33, 0
      %p102 = por %p100, %p101
      %s104 = sadd.s32 %s103, 1
      %p107 = scmp.eq.s32.totalorder %s27, 1
      %p108 = scmp.ne.s32.totalorder %s103, %s105
      %p109 = scmp.eq.s32.totalorder %s27, 0
      %p110 = por %p108, %p109
      %p111 = scmp.ne.s32.totalorder %s103, %s105
      %p112 = scmp.eq.s32.totalorder %s32, 1
      %p113 = por %p111, %p112
      %p114 = scmp.ne.s32.totalorder %s105, %s106
      %p115 = scmp.eq.s32.totalorder %s32, 0
      %p116 = por %p114, %p115
      %p117 = scmp.ne.s32.totalorder %s105, %s106
      %p118 = scmp.eq.s32.totalorder %s33, 1
      %p119 = por %p117, %p118
      %p121 = scmp.ne.s32.totalorder %s106, %s120
      %p122 = scmp.eq.s32.totalorder %s33, 0
      %p123 = por %p121, %p122
      %s125 = sadd.s32 %s124, 1
      %p128 = scmp.eq.s32.totalorder %s27, 1
      %p129 = scmp.ne.s32.totalorder %s124, %s126
      %p130 = scmp.eq.s32.totalorder %s27, 0
      %p131 = por %p129, %p130
      %p132 = scmp.ne.s32.totalorder %s124, %s126
      %p133 = scmp.eq.s32.totalorder %s32, 1
      %p134 = por %p132, %p133
      %p135 = scmp.ne.s32.totalorder %s126, %s127
      %p136 = scmp.eq.s32.totalorder %s32, 0
      %p137 = por %p135, %p136
      %p138 = scmp.ne.s32.totalorder %s126, %s127
      %p139 = scmp.eq.s32.totalorder %s33, 1
      %p140 = por %p138, %p139
      %p142 = scmp.ne.s32.totalorder %s127, %s141
      %p143 = scmp.eq.s32.totalorder %s33, 0
      %p144 = por %p142, %p143
      %s146 = sadd.s32 %s145, 1
      %p149 = scmp.eq.s32.totalorder %s27, 1
      %p150 = scmp.ne.s32.totalorder %s145, %s147
      %p151 = scmp.eq.s32.totalorder %s27, 0
      %p152 = por %p150, %p151
      %p153 = scmp.ne.s32.totalorder %s145, %s147
      %p154 = scmp.eq.s32.totalorder %s32, 1
      %p155 = por %p153, %p154
      %p156 = scmp.ne.s32.totalorder %s147, %s148
      %p157 = scmp.eq.s32.totalorder %s32, 0
      %p158 = por %p156, %p157
      %p159 = scmp.ne.s32.totalorder %s147, %s148
      %p160 = scmp.eq.s32.totalorder %s33, 1
      %p161 = por %p159, %p160
      %p163 = scmp.ne.s32.totalorder %s148, %s162
      %p164 = scmp.eq.s32.totalorder %s33, 0
      %p165 = por %p163, %p164
      %s167 = sadd.s32 %s166, 1
      %p170 = scmp.eq.s32.totalorder %s27, 1
      %p171 = scmp.ne.s32.totalorder %s166, %s168
      %p172 = scmp.eq.s32.totalorder %s27, 0
      %p173 = por %p171, %p172
      %p174 = scmp.ne.s32.totalorder %s166, %s168
      %p175 = scmp.eq.s32.totalorder %s32, 1
      %p176 = por %p174, %p175
      %p177 = scmp.ne.s32.totalorder %s168, %s169
      %p178 = scmp.eq.s32.totalorder %s32, 0
      %p179 = por %p177, %p178
      %p180 = scmp.ne.s32.totalorder %s168, %s169
      %p181 = scmp.eq.s32.totalorder %s33, 1
      %p182 = por %p180, %p181
      %p184 = scmp.ne.s32.totalorder %s169, %s183
      %p185 = scmp.eq.s32.totalorder %s33, 0
      %p186 = por %p184, %p185
      %s188 = sadd.s32 %s187, 1
      %p191 = scmp.eq.s32.totalorder %s27, 1
      %p192 = scmp.ne.s32.totalorder %s187, %s189
      %p193 = scmp.eq.s32.totalorder %s27, 0
      %p194 = por %p192, %p193
      %p195 = scmp.ne.s32.totalorder %s187, %s189
      %p196 = scmp.eq.s32.totalorder %s32, 1
      %p197 = por %p195, %p196
      %p198 = scmp.ne.s32.totalorder %s189, %s190
      %p199 = scmp.eq.s32.totalorder %s32, 0
      %p200 = por %p198, %p199
      %p201 = scmp.ne.s32.totalorder %s189, %s190
      %p202 = scmp.eq.s32.totalorder %s33, 1
      %p203 = por %p201, %p202
      %p205 = scmp.ne.s32.totalorder %s190, %s204
      %p206 = scmp.eq.s32.totalorder %s33, 0
      %p207 = por %p205, %p206
      %s209 = sadd.s32 %s208, 1
      %p212 = scmp.eq.s32.totalorder %s27, 1
      %p213 = scmp.ne.s32.totalorder %s208, %s210
      %p214 = scmp.eq.s32.totalorder %s27, 0
      %p215 = por %p213, %p214
      %p216 = scmp.ne.s32.totalorder %s208, %s210
      %p217 = scmp.eq.s32.totalorder %s32, 1
      %p218 = por %p216, %p217
      %p219 = scmp.ne.s32.totalorder %s210, %s211
      %p220 = scmp.eq.s32.totalorder %s32, 0
      %p221 = por %p219, %p220
      %p222 = scmp.ne.s32.totalorder %s210, %s211
      %p223 = scmp.eq.s32.totalorder %s33, 1
      %p224 = por %p222, %p223
      %p226 = scmp.ne.s32.totalorder %s211, %s225
      %p227 = scmp.eq.s32.totalorder %s33, 0
      %p228 = por %p226, %p227
      %s230 = sadd.s32 %s229, 1
      %p233 = scmp.eq.s32.totalorder %s27, 1
      %p234 = scmp.ne.s32.totalorder %s229, %s231
      %p235 = scmp.eq.s32.totalorder %s27, 0
      %p236 = por %p234, %p235
      %p237 = scmp.ne.s32.totalorder %s229, %s231
      %p238 = scmp.eq.s32.totalorder %s32, 1
      %p239 = por %p237, %p238
      %p240 = scmp.ne.s32.totalorder %s231, %s232
      %p241 = scmp.eq.s32.totalorder %s32, 0
      %p242 = por %p240, %p241
      %p243 = scmp.ne.s32.totalorder %s231, %s232
      %p244 = scmp.eq.s32.totalorder %s33, 1
      %p245 = por %p243, %p244
      %p247 = scmp.ne.s32.totalorder %s232, %s246
      %p248 = scmp.eq.s32.totalorder %s33, 0
      %p249 = por %p247, %p248
      %s250 = ssub.s32 %s27, %s34
      %p251 = scmp.eq.s32.totalorder %s250, 0
      %s253 = sadd.s32 %s252, 1
      %s254 = scalar_select %p251, %s252, %s253
      %p257 = pneg %p251
      %p258 = scmp.eq.s32.totalorder %s27, 1
      %p259 = por %p257, %p258
      %p260 = scmp.ne.s32.totalorder %s252, %s255
      %p261 = scmp.eq.s32.totalorder %s27, 0
      %p262 = por %p260, %p261
      %p263 = scmp.ne.s32.totalorder %s252, %s255
      %p264 = scmp.eq.s32.totalorder %s32, 1
      %p265 = por %p263, %p264
      %p266 = scmp.ne.s32.totalorder %s255, %s256
      %p267 = scmp.eq.s32.totalorder %s32, 0
      %p268 = por %p266, %p267
      %p269 = scmp.ne.s32.totalorder %s255, %s256
      %p270 = scmp.eq.s32.totalorder %s33, 1
      %p271 = por %p269, %p270
      %p273 = scmp.ne.s32.totalorder %s256, %s272
      %p274 = scmp.eq.s32.totalorder %s33, 0
      %p275 = por %p273, %p274
      %s276 = ssub.s32 %s27, %s34
      %p277 = scmp.eq.s32.totalorder %s276, 0
      %s279 = sadd.s32 %s278, 1
      %s280 = scalar_select %p277, %s278, %s279
      %p283 = pneg %p277
      %p284 = scmp.eq.s32.totalorder %s27, 1
      %p285 = por %p283, %p284
      %p286 = scmp.ne.s32.totalorder %s278, %s281
      %p287 = scmp.eq.s32.totalorder %s27, 0
      %p288 = por %p286, %p287
      %p289 = scmp.ne.s32.totalorder %s278, %s281
      %p290 = scmp.eq.s32.totalorder %s32, 1
      %p291 = por %p289, %p290
      %p292 = scmp.ne.s32.totalorder %s281, %s282
      %p293 = scmp.eq.s32.totalorder %s32, 0
      %p294 = por %p292, %p293
      %p295 = scmp.ne.s32.totalorder %s281, %s282
      %p296 = scmp.eq.s32.totalorder %s33, 1
      %p297 = por %p295, %p296
      %p299 = scmp.ne.s32.totalorder %s282, %s298
      %p300 = scmp.eq.s32.totalorder %s33, 0
      %p301 = por %p299, %p300
      %p302 = scmp.le.s32.totalorder 1, %s27
      %p303 = scmp.lt.s32.totalorder %s27, 3
      %p304 = pnand %p302, %p303
      %p305 = pneg %p304
      // Predicated region
      $region9: #{tpu_custom_call.1} parent=5 // pred_check
        _
      $region10: #{tpu_custom_call.1} parent=5 // pred_check_branch
        %307 = sbr.rel (%p304) target = $region12
      $region11: #{tpu_custom_call.1} parent=5 // pred_region
        %s308 = ssub.s32 %s27, 1
        // Predicated region
        $region13: #{tpu_custom_call.1} parent=11 // pred_check
          %p309 = pneg %p74
        $region14: #{tpu_custom_call.1} parent=11 // pred_check_branch
          %311 = sbr.rel (%p309) target = $region16
        $region15: #{tpu_custom_call.1} parent=11 // pred_region
          _
        $region16: #{tpu_custom_call.1} parent=11 // pred_fallthru
          _
        // Predicated region
        $region17: #{tpu_custom_call.1} parent=11 // pred_check
          %p312 = pneg %p95
        $region18: #{tpu_custom_call.1} parent=11 // pred_check_branch
          %314 = sbr.rel (%p312) target = $region20
        $region19: #{tpu_custom_call.1} parent=11 // pred_region
          _
        $region20: #{tpu_custom_call.1} parent=11 // pred_fallthru
          _
        // Predicated region
        $region21: #{tpu_custom_call.1} parent=11 // pred_check
          %p315 = pneg %p116
        $region22: #{tpu_custom_call.1} parent=11 // pred_check_branch
          %317 = sbr.rel (%p315) target = $region24
        $region23: #{tpu_custom_call.1} parent=11 // pred_region
          _
        $region24: #{tpu_custom_call.1} parent=11 // pred_fallthru
          _
        // Predicated region
        $region25: #{tpu_custom_call.1} parent=11 // pred_check
          %p318 = pneg %p137
        $region26: #{tpu_custom_call.1} parent=11 // pred_check_branch
          %320 = sbr.rel (%p318) target = $region28
        $region27: #{tpu_custom_call.1} parent=11 // pred_region
          _
        $region28: #{tpu_custom_call.1} parent=11 // pred_fallthru
          _
        // Predicated region
        $region29: #{tpu_custom_call.1} parent=11 // pred_check
          %p321 = pneg %p158
        $region30: #{tpu_custom_call.1} parent=11 // pred_check_branch
          %323 = sbr.rel (%p321) target = $region32
        $region31: #{tpu_custom_call.1} parent=11 // pred_region
          _
        $region32: #{tpu_custom_call.1} parent=11 // pred_fallthru
          _
        // Predicated region
        $region33: #{tpu_custom_call.1} parent=11 // pred_check
          %p324 = pneg %p179
        $region34: #{tpu_custom_call.1} parent=11 // pred_check_branch
          %326 = sbr.rel (%p324) target = $region36
        $region35: #{tpu_custom_call.1} parent=11 // pred_region
          _
        $region36: #{tpu_custom_call.1} parent=11 // pred_fallthru
          _
        // Predicated region
        $region37: #{tpu_custom_call.1} parent=11 // pred_check
          %p327 = pneg %p200
        $region38: #{tpu_custom_call.1} parent=11 // pred_check_branch
          %329 = sbr.rel (%p327) target = $region40
        $region39: #{tpu_custom_call.1} parent=11 // pred_region
          _
        $region40: #{tpu_custom_call.1} parent=11 // pred_fallthru
          _
        // Predicated region
        $region41: #{tpu_custom_call.1} parent=11 // pred_check
          %p330 = pneg %p221
        $region42: #{tpu_custom_call.1} parent=11 // pred_check_branch
          %332 = sbr.rel (%p330) target = $region44
        $region43: #{tpu_custom_call.1} parent=11 // pred_region
          _
        $region44: #{tpu_custom_call.1} parent=11 // pred_fallthru
          _
        // Predicated region
        $region45: #{tpu_custom_call.1} parent=11 // pred_check
          %p333 = pneg %p242
        $region46: #{tpu_custom_call.1} parent=11 // pred_check_branch
          %335 = sbr.rel (%p333) target = $region48
        $region47: #{tpu_custom_call.1} parent=11 // pred_region
          _
        $region48: #{tpu_custom_call.1} parent=11 // pred_fallthru
          _
      $region12: #{tpu_custom_call.1} parent=5 // pred_fallthru
        _
      %p336 = scmp.lt.s32.totalorder %s27, 2
      // Predicated region
      $region49: #{tpu_custom_call.1} parent=5 // pred_check
        %p337 = pneg %p336
      $region50: #{tpu_custom_call.1} parent=5 // pred_check_branch
        %339 = sbr.rel (%p337) target = $region52
      $region51: #{tpu_custom_call.1} parent=5 // pred_region
        // Predicated region
        $region53: #{tpu_custom_call.1} parent=51 // pred_check
          %p340 = pneg %p47
        $region54: #{tpu_custom_call.1} parent=51 // pred_check_branch
          %342 = sbr.rel (%p340) target = $region56
        $region55: #{tpu_custom_call.1} parent=51 // pred_region
          %s343 = sand.u32 %s37, 1
          %s344 = scalar_lea.sflag [#allocation5], %s343
          %s345 = sand.u32 %s37, 1
          %s346 = smul.addr %s345, 32
          %s347 = scalar_lea.vmem [#allocation4], %s346
          %s348 = smul.u32 2, %s27
          %s350 = ssub.s32 512, 512
          %351 = vsyncadd %s344, %s350
          %s352 = smul.addr %s348, 2
          %s353 = smul.addr %s352, 128
          %s354 = scalar_lea.hbm %s0, %s353
          %s355 = sshll.u32 %s347, 4
          %s356 = int_to_ptr.vmem [resolvable:$true] %s355
          %361 = dma.hbm_to_vmem [thread:$0]  %s354, 512, %s356, %s344, 128, 128, 8
        $region56: #{tpu_custom_call.1} parent=51 // pred_fallthru
          _
      $region52: #{tpu_custom_call.1} parent=5 // pred_fallthru
        _
      %p362 = scmp.le.s32.totalorder 1, %s27
      %p363 = scmp.lt.s32.totalorder %s27, 3
      %p364 = pnand %p362, %p363
      %p365 = pneg %p364
      // Predicated region
      $region57: #{tpu_custom_call.1} parent=5 // pred_check
        _
      $region58: #{tpu_custom_call.1} parent=5 // pred_check_branch
        %367 = sbr.rel (%p364) target = $region60
      $region59: #{tpu_custom_call.1} parent=5 // pred_region
        %s368 = ssub.s32 %s27, 1
        %s369 = sand.u32 %s40, 1
        %s370 = scalar_lea.sflag [#allocation5], %s369
        %s371 = sand.u32 %s40, 1
        %s372 = smul.addr %s371, 32
        %s373 = scalar_lea.vmem [#allocation4], %s372
        // Predicated region
        $region61: #{tpu_custom_call.1} parent=59 // pred_check
          %p374 = pneg %p53
        $region62: #{tpu_custom_call.1} parent=59 // pred_check_branch
          %376 = sbr.rel (%p374) target = $region64
        $region63: #{tpu_custom_call.1} parent=59 // pred_region
          %377 = dma.done %s370, 512
        $region64: #{tpu_custom_call.1} parent=59 // pred_fallthru
          _
        %s378 = sand.u32 %s40, 1
        %s379 = scalar_lea.sflag [#allocation5], %s378
        %s380 = sand.u32 %s40, 1
        %s381 = smul.addr %s380, 32
        %s382 = scalar_lea.vmem [#allocation4], %s381
        %p383 = pneg %p53
        %p384 = pneg %p50
        %p385 = pneg %p74
        %p386 = pneg %p71
        %p387 = pneg %p95
        %p388 = pneg %p92
        %p389 = pneg %p116
        %p390 = pneg %p113
        %p391 = pneg %p137
        %p392 = pneg %p134
        %p393 = pneg %p158
        %p394 = pneg %p155
        %p395 = pneg %p179
        %p396 = pneg %p176
        %p397 = pneg %p200
        %p398 = pneg %p197
        %p399 = pneg %p221
        %p400 = pneg %p218
        %p401 = pneg %p242
        %p402 = pneg %p239
        %p403 = pneg %p268
        %p404 = pneg %p265
        %s405 = sand.u32 %s255, 1
        %s406 = scalar_lea.sflag [#allocation6], %s405
        %s407 = sand.u32 %s255, 1
        %s408 = smul.addr %s407, 32
        %s409 = scalar_lea.vmem [#allocation7], %s408
        %p410 = pneg %p294
        %p411 = pneg %p291
        %s412 = sand.u32 %s281, 1
        %s413 = scalar_lea.sflag [#allocation9], %s412
        %s414 = sand.u32 %s281, 1
        %s415 = smul.addr %s414, 16
        %s416 = scalar_lea.vmem [#allocation8], %s415
        %s417 = smul.u32 2, %s32
        %s418 = smul.u32 2, %s32
        %s419 = smul.u32 2, %s32
        %vm421 = vcmask 516096
        %422 = vst.msk [vmem:[#allocation2] sm:$0x1] %vm421, 0.0
        %423 = vst.msk [vmem:[#allocation2 + $0x23] sm:$0x1] %vm421, 0.0
        %vm424 = vcmask 517120
        %425 = vst.msk [vmem:[#allocation2 + $0x11] sm:$0x3] %vm424, 0.0
        %v426 = vld [vmem:[%s373] sm:$0xff]
        %v427 = vld [vmem:[%s373 + $0x8] sm:$0xff]
        %vm428 = vcmask 523264
        %429 = vst.msk [vmem:[#allocation2 + $0x1] sm:$0xff] %vm428, %v426
        %430 = vst.msk [vmem:[#allocation2 + $0x9] sm:$0xff] %vm428, %v427
        %s431 = scalar_lea.vmem %s373, 16 [#allocation4]
        %v432 = vld [vmem:[%s431] sm:$0xff]
        %v433 = vld [vmem:[%s431 + $0x8] sm:$0xff]
        %434 = vst.msk [vmem:[#allocation2 + $0x13] sm:$0xff] %vm428, %v432
        %435 = vst.msk [vmem:[#allocation2 + $0x1b] sm:$0xff] %vm428, %v433
        %v436 = vld [vmem:[#allocation2] sm:$0xff]
        %v437 = vld [vmem:[#allocation2 + $0x8] sm:$0xff]
        %v438 = vld [vmem:[#allocation2 + $0x10] sm:$0xff]
        %v439 = vld [vmem:[#allocation2 + $0x18] sm:$0xff]
        %v440 = vld [vmem:[#allocation2 + $0x20] sm:$0x3]
        %v441 = vpack.c.bf16 %v437, %v436
        %v442 = vpack.c.bf16 %v439, %v438
        %v443 = vpack.c.bf16 %v440, %v440
        %v444 = vld [vmem:[%s1] sm:$0xf]
        %v445 = vld [vmem:[%s1 + $0x4] sm:$0xf]
        %v446 = vld [vmem:[%s1 + $0x8] sm:$0xf]
        %v447 = vld [vmem:[%s1 + $0xc] sm:$0xf]
        %v448 = vld [vmem:[%s1 + $0x10] sm:$0xf]
        %v449 = vld [vmem:[%s1 + $0x14] sm:$0xf]
        %v450 = vld [vmem:[%s1 + $0x18] sm:$0xf]
        %v451 = vld [vmem:[%s1 + $0x1c] sm:$0xf]
        %v452 = vld [vmem:[#allocation2 + $0x1] sm:$0xff]
        %v453 = vld [vmem:[#allocation2 + $0x9] sm:$0xff]
        %v454 = vld [vmem:[#allocation2 + $0x11] sm:$0xff]
        %v455 = vld [vmem:[#allocation2 + $0x19] sm:$0xff]
        %v456 = vld [vmem:[#allocation2 + $0x21] sm:$0x3]
        %v457 = vpack.c.bf16 %v453, %v452
        %v458 = vpack.c.bf16 %v455, %v454
        %v459 = vpack.c.bf16 %v456, %v456
        %s460 = scalar_lea.vmem %s1, 32
        %v461 = vld [vmem:[%s460] sm:$0xf]
        %v462 = vld [vmem:[%s460 + $0x4] sm:$0xf]
        %v463 = vld [vmem:[%s460 + $0x8] sm:$0xf]
        %v464 = vld [vmem:[%s460 + $0xc] sm:$0xf]
        %v465 = vld [vmem:[%s460 + $0x10] sm:$0xf]
        %v466 = vld [vmem:[%s460 + $0x14] sm:$0xf]
        %v467 = vld [vmem:[%s460 + $0x18] sm:$0xf]
        %v468 = vld [vmem:[%s460 + $0x1c] sm:$0xf]
        %v477 = vunpack.c.l.b16 %v461
        %v478 = vunpack.c.l.b16 %v462
        %v479 = vunpack.c.l.b16 %v463
        %v480 = vunpack.c.l.b16 %v464
        %v481 = vunpack.c.l.b16 %v465
        %v482 = vunpack.c.l.b16 %v466
        %v483 = vunpack.c.l.b16 %v467
        %v484 = vunpack.c.l.b16 %v468
        %v485 = vpack.c.b16 %v478, %v477
        %v486 = vpack.c.b16 %v480, %v479
        %v487 = vpack.c.b16 %v482, %v481
        %v488 = vpack.c.b16 %v484, %v483
        %v494 = vsel %vm428, %v457, 0
        %v497 = vsel %vm428, %v458, 0
        %v500 = vsel %vm428, %v459, 0
        %502 = vmatprep.subr.bf16.mxu0 0
        %503 = vmatpush1.bf16.msra.mxu0 %v485
        %504 = vmatprep.subr.bf16.mxu0 0
        %505 = vmatpush1.bf16.msra.mxu0 %v486
        %506 = vmatprep.subr.bf16.mxu0 0
        %507 = vmatpush1.bf16.msra.mxu0 %v487
        %508 = vmatprep.subr.bf16.mxu0 0
        %509 = vmatpush1.bf16.msra.mxu0 %v488
        %510 = vmatprep.subr.bf16.mxu0 0
        %511 = vmatpush1.bf16.msra.mxu0 0
        %512 = vmatprep.subr.bf16.mxu0 0
        %513 = vmatpush1.bf16.msra.mxu0 0
        %514 = vmatprep.subr.bf16.mxu0 0
        %515 = vmatpush1.bf16.msra.mxu0 0
        %516 = vmatprep.subr.bf16.mxu0 0
        %517 = vmatpush1.bf16.msra.mxu0 0
        %518 = vmatprep.subr.bf16.mxu0 0
        %519 = vmatpush1.bf16.msra.mxu0 0
        %520 = vmatprep.subr.bf16.mxu0 0
        %521 = vmatpush1.bf16.msra.mxu0 0
        %522 = vmatprep.subr.bf16.mxu0 0
        %523 = vmatpush1.bf16.msra.mxu0 0
        %524 = vmatprep.subr.bf16.mxu0 0
        %525 = vmatpush1.bf16.msra.mxu0 0
        %526 = vmatprep.subr.bf16.mxu0 0
        %527 = vmatpush1.bf16.msra.mxu0 0
        %528 = vmatprep.subr.bf16.mxu0 0
        %529 = vmatpush1.bf16.msra.mxu0 0
        %530 = vmatprep.subr.bf16.mxu0 0
        %531 = vmatpush1.bf16.msra.mxu0 0
        %532 = vmatprep.subr.bf16.mxu0 0
        %533 = vmatpush1.bf16.msra.mxu0 0
        %534 = vmatprep.mubr.bf16.mxu0 0
        %535 = vmatmul.mubr.bf16.gmra.mrb[0].mxu0 %v494
        %v536 = vpop.f32.mrb[0].mxu0
        %v537 = vadd.f32 0.0, %v536
        %v538 = vpop.f32.mrb[0].mxu0
        %v539 = vpop.f32.mrb[0].mxu0
        %v540 = vadd.f32 0.0, %v539
        %v541 = vpop.f32.mrb[0].mxu0
        %542 = vmatprep.mubr.bf16.mxu0 0
        %543 = vmatmul.mubr.bf16.gmra.mrb[0].mxu0 %v497
        %v544 = vpop.f32.mrb[0].mxu0
        %v545 = vadd.f32 0.0, %v544
        %v546 = vpop.f32.mrb[0].mxu0
        %v547 = vpop.f32.mrb[0].mxu0
        %v548 = vadd.f32 0.0, %v547
        %v549 = vpop.f32.mrb[0].mxu0
        %550 = vmatprep.mubr.bf16.mxu0 0
        %551 = vmatmul.mubr.bf16.gmra.mrb[0].mxu0 %v500
        %v552 = vpop.f32.mrb[0].mxu0
        %v553 = vadd.f32 0.0, %v552
        %v554 = vpop.f32.mrb[0].mxu0
        %v555 = vpop.f32.mrb[0].mxu0
        %v556 = vpop.f32.mrb[0].mxu0
        %557 = vdwg.mxu0
        %v566 = vunpack.c.l.b16 %v444
        %v567 = vunpack.c.l.b16 %v445
        %v568 = vunpack.c.l.b16 %v446
        %v569 = vunpack.c.l.b16 %v447
        %v570 = vunpack.c.l.b16 %v448
        %v571 = vunpack.c.l.b16 %v449
        %v572 = vunpack.c.l.b16 %v450
        %v573 = vunpack.c.l.b16 %v451
        %v574 = vpack.c.b16 %v567, %v566
        %v575 = vpack.c.b16 %v569, %v568
        %v576 = vpack.c.b16 %v571, %v570
        %v577 = vpack.c.b16 %v573, %v572
        %v583 = vsel %vm428, %v441, 0
        %v586 = vsel %vm428, %v442, 0
        %v589 = vsel %vm428, %v443, 0
        %591 = vmatprep.subr.bf16.mxu0 0
        %592 = vmatpush1.bf16.msra.mxu0 %v574
        %593 = vmatprep.subr.bf16.mxu0 0
        %594 = vmatpush1.bf16.msra.mxu0 %v575
        %595 = vmatprep.subr.bf16.mxu0 0
        %596 = vmatpush1.bf16.msra.mxu0 %v576
        %597 = vmatprep.subr.bf16.mxu0 0
        %598 = vmatpush1.bf16.msra.mxu0 %v577
        %599 = vmatprep.subr.bf16.mxu0 0
        %600 = vmatpush1.bf16.msra.mxu0 0
        %601 = vmatprep.subr.bf16.mxu0 0
        %602 = vmatpush1.bf16.msra.mxu0 0
        %603 = vmatprep.subr.bf16.mxu0 0
        %604 = vmatpush1.bf16.msra.mxu0 0
        %605 = vmatprep.subr.bf16.mxu0 0
        %606 = vmatpush1.bf16.msra.mxu0 0
        %607 = vmatprep.subr.bf16.mxu0 0
        %608 = vmatpush1.bf16.msra.mxu0 0
        %609 = vmatprep.subr.bf16.mxu0 0
        %610 = vmatpush1.bf16.msra.mxu0 0
        %611 = vmatprep.subr.bf16.mxu0 0
        %612 = vmatpush1.bf16.msra.mxu0 0
        %613 = vmatprep.subr.bf16.mxu0 0
        %614 = vmatpush1.bf16.msra.mxu0 0
        %615 = vmatprep.subr.bf16.mxu0 0
        %616 = vmatpush1.bf16.msra.mxu0 0
        %617 = vmatprep.subr.bf16.mxu0 0
        %618 = vmatpush1.bf16.msra.mxu0 0
        %619 = vmatprep.subr.bf16.mxu0 0
        %620 = vmatpush1.bf16.msra.mxu0 0
        %621 = vmatprep.subr.bf16.mxu0 0
        %622 = vmatpush1.bf16.msra.mxu0 0
        %623 = vmatprep.mubr.bf16.mxu0 0
        %624 = vmatmul.mubr.bf16.gmra.mrb[0].mxu0 %v583
        %v625 = vpop.f32.mrb[0].mxu0
        %v626 = vadd.f32 %v537, %v625
        %v627 = vpop.f32.mrb[0].mxu0
        %v628 = vpop.f32.mrb[0].mxu0
        %v629 = vadd.f32 %v540, %v628
        %v630 = vpop.f32.mrb[0].mxu0
        %631 = vmatprep.mubr.bf16.mxu0 0
        %632 = vmatmul.mubr.bf16.gmra.mrb[0].mxu0 %v586
        %v633 = vpop.f32.mrb[0].mxu0
        %v634 = vadd.f32 %v545, %v633
        %v635 = vpop.f32.mrb[0].mxu0
        %v636 = vpop.f32.mrb[0].mxu0
        %v637 = vadd.f32 %v548, %v636
        %v638 = vpop.f32.mrb[0].mxu0
        %639 = vmatprep.mubr.bf16.mxu0 0
        %640 = vmatmul.mubr.bf16.gmra.mrb[0].mxu0 %v589
        %v641 = vpop.f32.mrb[0].mxu0
        %v642 = vadd.f32 %v553, %v641
        %v643 = vpop.f32.mrb[0].mxu0
        %v644 = vpop.f32.mrb[0].mxu0
        %v645 = vpop.f32.mrb[0].mxu0
        %646 = vdwg.mxu0
        %v647 = vld [vmem:[#allocation2 + $0x2] sm:$0xff]
        %v648 = vld [vmem:[#allocation2 + $0xa] sm:$0xff]
        %v649 = vld [vmem:[#allocation2 + $0x12] sm:$0xff]
        %v650 = vld [vmem:[#allocation2 + $0x1a] sm:$0xff]
        %v651 = vld [vmem:[#allocation2 + $0x22] sm:$0x3]
        %v652 = vpack.c.bf16 %v648, %v647
        %v653 = vpack.c.bf16 %v650, %v649
        %v654 = vpack.c.bf16 %v651, %v651
        %s655 = scalar_lea.vmem %s1, 64
        %v656 = vld [vmem:[%s655] sm:$0xf]
        %v657 = vld [vmem:[%s655 + $0x4] sm:$0xf]
        %v658 = vld [vmem:[%s655 + $0x8] sm:$0xf]
        %v659 = vld [vmem:[%s655 + $0xc] sm:$0xf]
        %v660 = vld [vmem:[%s655 + $0x10] sm:$0xf]
        %v661 = vld [vmem:[%s655 + $0x14] sm:$0xf]
        %v662 = vld [vmem:[%s655 + $0x18] sm:$0xf]
        %v663 = vld [vmem:[%s655 + $0x1c] sm:$0xf]
        %v672 = vunpack.c.l.b16 %v656
        %v673 = vunpack.c.l.b16 %v657
        %v674 = vunpack.c.l.b16 %v658
        %v675 = vunpack.c.l.b16 %v659
        %v676 = vunpack.c.l.b16 %v660
        %v677 = vunpack.c.l.b16 %v661
        %v678 = vunpack.c.l.b16 %v662
        %v679 = vunpack.c.l.b16 %v663
        %v680 = vpack.c.b16 %v673, %v672
        %v681 = vpack.c.b16 %v675, %v674
        %v682 = vpack.c.b16 %v677, %v676
        %v683 = vpack.c.b16 %v679, %v678
        %v689 = vsel %vm428, %v652, 0
        %v692 = vsel %vm428, %v653, 0
        %v695 = vsel %vm428, %v654, 0
        %697 = vmatprep.subr.bf16.mxu0 0
        %698 = vmatpush1.bf16.msra.mxu0 %v680
        %699 = vmatprep.subr.bf16.mxu0 0
        %700 = vmatpush1.bf16.msra.mxu0 %v681
        %701 = vmatprep.subr.bf16.mxu0 0
        %702 = vmatpush1.bf16.msra.mxu0 %v682
        %703 = vmatprep.subr.bf16.mxu0 0
        %704 = vmatpush1.bf16.msra.mxu0 %v683
        %705 = vmatprep.subr.bf16.mxu0 0
        %706 = vmatpush1.bf16.msra.mxu0 0
        %707 = vmatprep.subr.bf16.mxu0 0
        %708 = vmatpush1.bf16.msra.mxu0 0
        %709 = vmatprep.subr.bf16.mxu0 0
        %710 = vmatpush1.bf16.msra.mxu0 0
        %711 = vmatprep.subr.bf16.mxu0 0
        %712 = vmatpush1.bf16.msra.mxu0 0
        %713 = vmatprep.subr.bf16.mxu0 0
        %714 = vmatpush1.bf16.msra.mxu0 0
        %715 = vmatprep.subr.bf16.mxu0 0
        %716 = vmatpush1.bf16.msra.mxu0 0
        %717 = vmatprep.subr.bf16.mxu0 0
        %718 = vmatpush1.bf16.msra.mxu0 0
        %719 = vmatprep.subr.bf16.mxu0 0
        %720 = vmatpush1.bf16.msra.mxu0 0
        %721 = vmatprep.subr.bf16.mxu0 0
        %722 = vmatpush1.bf16.msra.mxu0 0
        %723 = vmatprep.subr.bf16.mxu0 0
        %724 = vmatpush1.bf16.msra.mxu0 0
        %725 = vmatprep.subr.bf16.mxu0 0
        %726 = vmatpush1.bf16.msra.mxu0 0
        %727 = vmatprep.subr.bf16.mxu0 0
        %728 = vmatpush1.bf16.msra.mxu0 0
        %729 = vmatprep.mubr.bf16.mxu0 0
        %730 = vmatmul.mubr.bf16.gmra.mrb[0].mxu0 %v689
        %v731 = vpop.f32.mrb[0].mxu0
        %v732 = vadd.f32 0.0, %v731
        %v733 = vpop.f32.mrb[0].mxu0
        %v734 = vpop.f32.mrb[0].mxu0
        %v735 = vadd.f32 0.0, %v734
        %v736 = vpop.f32.mrb[0].mxu0
        %737 = vmatprep.mubr.bf16.mxu0 0
        %738 = vmatmul.mubr.bf16.gmra.mrb[0].mxu0 %v692
        %v739 = vpop.f32.mrb[0].mxu0
        %v740 = vadd.f32 0.0, %v739
        %v741 = vpop.f32.mrb[0].mxu0
        %v742 = vpop.f32.mrb[0].mxu0
        %v743 = vadd.f32 0.0, %v742
        %v744 = vpop.f32.mrb[0].mxu0
        %745 = vmatprep.mubr.bf16.mxu0 0
        %746 = vmatmul.mubr.bf16.gmra.mrb[0].mxu0 %v695
        %v747 = vpop.f32.mrb[0].mxu0
        %v748 = vadd.f32 0.0, %v747
        %v749 = vpop.f32.mrb[0].mxu0
        %v750 = vpop.f32.mrb[0].mxu0
        %v751 = vpop.f32.mrb[0].mxu0
        %752 = vdwg.mxu0
        %v753 = vadd.f32 %v626, %v732
        %v754 = vadd.f32 %v629, %v735
        %v755 = vadd.f32 %v634, %v740
        %v756 = vadd.f32 %v637, %v743
        %v757 = vadd.f32 %v642, %v748
        %v758 = vld [vmem:[%s2] sm:$0x1]
        %v760 = vlaneseq
        %v761 = vshrl.u32 %v760, 7
        %v762 = vsub.s32 0, %v761
        %v763 = vrot.slane %v758, %v762
        %v765 = vmul.f32 %v753, %v763
        %v766 = vmul.f32 %v754, %v763
        %v767 = vmul.f32 %v755, %v763
        %v768 = vmul.f32 %v756, %v763
        %v769 = vmul.f32 %v757, %v763
        %v770 = vld [vmem:[%s3] sm:$0x1]
        %v772 = vlaneseq
        %v773 = vshrl.u32 %v772, 7
        %v774 = vsub.s32 0, %v773
        %v775 = vrot.slane %v770, %v774
        %v777 = vadd.f32 %v765, %v775
        %v778 = vadd.f32 %v766, %v775
        %v779 = vadd.f32 %v767, %v775
        %v780 = vadd.f32 %v768, %v775
        %v781 = vadd.f32 %v769, %v775
        %v782 = vmax.f32 %v777, 0.0
        %v783 = vmax.f32 %v778, 0.0
        %v784 = vmax.f32 %v779, 0.0
        %v785 = vmax.f32 %v780, 0.0
        %v786 = vmax.f32 %v781, 0.0
        %787 = vst [vmem:[#allocation3 + $0x1] sm:$0xff] %v782
        %788 = vst [vmem:[#allocation3 + $0x9] sm:$0xff] %v783
        %789 = vst [vmem:[#allocation3 + $0x11] sm:$0xff] %v784
        %790 = vst [vmem:[#allocation3 + $0x19] sm:$0xff] %v785
        %791 = vst [vmem:[#allocation3 + $0x21] sm:$0x3] %v786
        %792 = vst [vmem:[#allocation3] sm:$0x1] 0.0
        %793 = vst [vmem:[#allocation3 + $0x23] sm:$0x1] 0.0
        %794 = vst [vmem:[#allocation3 + $0x11] sm:$0x3] 0.0
        %v795 = vld [vmem:[#allocation3] sm:$0xff]
        %v796 = vld [vmem:[#allocation3 + $0x8] sm:$0xff]
        %v797 = vld [vmem:[#allocation3 + $0x10] sm:$0xff]
        %v798 = vld [vmem:[#allocation3 + $0x18] sm:$0xff]
        %v799 = vld [vmem:[#allocation3 + $0x20] sm:$0x3]
        %v800 = vpack.c.bf16 %v796, %v795
        %v801 = vpack.c.bf16 %v798, %v797
        %v802 = vpack.c.bf16 %v799, %v799
        %v803 = vld [vmem:[%s4] sm:$0xf]
        %v804 = vld [vmem:[%s4 + $0x4] sm:$0xf]
        %v805 = vld [vmem:[%s4 + $0x8] sm:$0xf]
        %v806 = vld [vmem:[%s4 + $0xc] sm:$0xf]
        %v807 = vld [vmem:[%s4 + $0x10] sm:$0xf]
        %v808 = vld [vmem:[%s4 + $0x14] sm:$0xf]
        %v809 = vld [vmem:[%s4 + $0x18] sm:$0xf]
        %v810 = vld [vmem:[%s4 + $0x1c] sm:$0xf]
        %v811 = vld [vmem:[%s4 + $0x20] sm:$0xf]
        %v812 = vld [vmem:[%s4 + $0x24] sm:$0xf]
        %v813 = vld [vmem:[%s4 + $0x28] sm:$0xf]
        %v814 = vld [vmem:[%s4 + $0x2c] sm:$0xf]
        %v815 = vld [vmem:[%s4 + $0x30] sm:$0xf]
        %v816 = vld [vmem:[%s4 + $0x34] sm:$0xf]
        %v817 = vld [vmem:[%s4 + $0x38] sm:$0xf]
        %v818 = vld [vmem:[%s4 + $0x3c] sm:$0xf]
        %v819 = vld [vmem:[#allocation3 + $0x1] sm:$0xff]
        %v820 = vld [vmem:[#allocation3 + $0x9] sm:$0xff]
        %v821 = vld [vmem:[#allocation3 + $0x11] sm:$0xff]
        %v822 = vld [vmem:[#allocation3 + $0x19] sm:$0xff]
        %v823 = vld [vmem:[#allocation3 + $0x21] sm:$0x3]
        %v824 = vpack.c.bf16 %v820, %v819
        %v825 = vpack.c.bf16 %v822, %v821
        %v826 = vpack.c.bf16 %v823, %v823
        %s827 = scalar_lea.vmem %s4, 64
        %v828 = vld [vmem:[%s827] sm:$0xf]
        %v829 = vld [vmem:[%s827 + $0x4] sm:$0xf]
        %v830 = vld [vmem:[%s827 + $0x8] sm:$0xf]
        %v831 = vld [vmem:[%s827 + $0xc] sm:$0xf]
        %v832 = vld [vmem:[%s827 + $0x10] sm:$0xf]
        %v833 = vld [vmem:[%s827 + $0x14] sm:$0xf]
        %v834 = vld [vmem:[%s827 + $0x18] sm:$0xf]
        %v835 = vld [vmem:[%s827 + $0x1c] sm:$0xf]
        %v836 = vld [vmem:[%s827 + $0x20] sm:$0xf]
        %v837 = vld [vmem:[%s827 + $0x24] sm:$0xf]
        %v838 = vld [vmem:[%s827 + $0x28] sm:$0xf]
        %v839 = vld [vmem:[%s827 + $0x2c] sm:$0xf]
        %v840 = vld [vmem:[%s827 + $0x30] sm:$0xf]
        %v841 = vld [vmem:[%s827 + $0x34] sm:$0xf]
        %v842 = vld [vmem:[%s827 + $0x38] sm:$0xf]
        %v843 = vld [vmem:[%s827 + $0x3c] sm:$0xf]
        %v860 = vunpack.c.l.b16 %v828
        %v861 = vunpack.c.l.b16 %v829
        %v862 = vunpack.c.l.b16 %v830
        %v863 = vunpack.c.l.b16 %v831
        %v864 = vunpack.c.l.b16 %v832
        %v865 = vunpack.c.l.b16 %v833
        %v866 = vunpack.c.l.b16 %v834
        %v867 = vunpack.c.l.b16 %v835
        %v868 = vunpack.c.l.b16 %v836
        %v869 = vunpack.c.l.b16 %v837
        %v870 = vunpack.c.l.b16 %v838
        %v871 = vunpack.c.l.b16 %v839
        %v872 = vunpack.c.l.b16 %v840
        %v873 = vunpack.c.l.b16 %v841
        %v874 = vunpack.c.l.b16 %v842
        %v875 = vunpack.c.l.b16 %v843
        %v876 = vpack.c.b16 %v861, %v860
        %v877 = vpack.c.b16 %v863, %v862
        %v878 = vpack.c.b16 %v865, %v864
        %v879 = vpack.c.b16 %v867, %v866
        %v880 = vpack.c.b16 %v869, %v868
        %v881 = vpack.c.b16 %v871, %v870
        %v882 = vpack.c.b16 %v873, %v872
        %v883 = vpack.c.b16 %v875, %v874
        %892 = vmatprep.subr.bf16.mxu0 0
        %893 = vmatpush1.bf16.msra.mxu0 %v876
        %894 = vmatprep.subr.bf16.mxu0 0
        %895 = vmatpush1.bf16.msra.mxu0 %v877
        %896 = vmatprep.subr.bf16.mxu0 0
        %897 = vmatpush1.bf16.msra.mxu0 %v878
        %898 = vmatprep.subr.bf16.mxu0 0
        %899 = vmatpush1.bf16.msra.mxu0 %v879
        %900 = vmatprep.subr.bf16.mxu0 0
        %901 = vmatpush1.bf16.msra.mxu0 %v880
        %902 = vmatprep.subr.bf16.mxu0 0
        %903 = vmatpush1.bf16.msra.mxu0 %v881
        %904 = vmatprep.subr.bf16.mxu0 0
        %905 = vmatpush1.bf16.msra.mxu0 %v882
        %906 = vmatprep.subr.bf16.mxu0 0
        %907 = vmatpush1.bf16.msra.mxu0 %v883
        %908 = vmatprep.subr.bf16.mxu0 0
        %909 = vmatpush1.bf16.msra.mxu0 0
        %910 = vmatprep.subr.bf16.mxu0 0
        %911 = vmatpush1.bf16.msra.mxu0 0
        %912 = vmatprep.subr.bf16.mxu0 0
        %913 = vmatpush1.bf16.msra.mxu0 0
        %914 = vmatprep.subr.bf16.mxu0 0
        %915 = vmatpush1.bf16.msra.mxu0 0
        %916 = vmatprep.subr.bf16.mxu0 0
        %917 = vmatpush1.bf16.msra.mxu0 0
        %918 = vmatprep.subr.bf16.mxu0 0
        %919 = vmatpush1.bf16.msra.mxu0 0
        %920 = vmatprep.subr.bf16.mxu0 0
        %921 = vmatpush1.bf16.msra.mxu0 0
        %922 = vmatprep.subr.bf16.mxu0 0
        %923 = vmatpush1.bf16.msra.mxu0 0
        %924 = vmatprep.mubr.bf16.mxu0 0
        %925 = vmatmul.mubr.bf16.gmra.mrb[0].mxu0 %v824
        %v926 = vpop.f32.mrb[0].mxu0
        %v927 = vadd.f32 0.0, %v926
        %v928 = vpop.f32.mrb[0].mxu0
        %v929 = vpop.f32.mrb[0].mxu0
        %v930 = vadd.f32 0.0, %v929
        %v931 = vpop.f32.mrb[0].mxu0
        %932 = vmatprep.mubr.bf16.mxu0 0
        %933 = vmatmul.mubr.bf16.gmra.mrb[0].mxu0 %v825
        %v934 = vpop.f32.mrb[0].mxu0
        %v935 = vadd.f32 0.0, %v934
        %v936 = vpop.f32.mrb[0].mxu0
        %v937 = vpop.f32.mrb[0].mxu0
        %v938 = vadd.f32 0.0, %v937
        %v939 = vpop.f32.mrb[0].mxu0
        %940 = vmatprep.mubr.bf16.mxu0 0
        %941 = vmatmul.mubr.bf16.gmra.mrb[0].mxu0 %v826
        %v942 = vpop.f32.mrb[0].mxu0
        %v943 = vadd.f32 0.0, %v942
        %v944 = vpop.f32.mrb[0].mxu0
        %v945 = vpop.f32.mrb[0].mxu0
        %v946 = vpop.f32.mrb[0].mxu0
        %947 = vdwg.mxu0
        %v964 = vunpack.c.l.b16 %v803
        %v965 = vunpack.c.l.b16 %v804
        %v966 = vunpack.c.l.b16 %v805
        %v967 = vunpack.c.l.b16 %v806
        %v968 = vunpack.c.l.b16 %v807
        %v969 = vunpack.c.l.b16 %v808
        %v970 = vunpack.c.l.b16 %v809
        %v971 = vunpack.c.l.b16 %v810
        %v972 = vunpack.c.l.b16 %v811
        %v973 = vunpack.c.l.b16 %v812
        %v974 = vunpack.c.l.b16 %v813
        %v975 = vunpack.c.l.b16 %v814
        %v976 = vunpack.c.l.b16 %v815
        %v977 = vunpack.c.l.b16 %v816
        %v978 = vunpack.c.l.b16 %v817
        %v979 = vunpack.c.l.b16 %v818
        %v980 = vpack.c.b16 %v965, %v964
        %v981 = vpack.c.b16 %v967, %v966
        %v982 = vpack.c.b16 %v969, %v968
        %v983 = vpack.c.b16 %v971, %v970
        %v984 = vpack.c.b16 %v973, %v972
        %v985 = vpack.c.b16 %v975, %v974
        %v986 = vpack.c.b16 %v977, %v976
        %v987 = vpack.c.b16 %v979, %v978
        %996 = vmatprep.subr.bf16.mxu0 0
        %997 = vmatpush1.bf16.msra.mxu0 %v980
        %998 = vmatprep.subr.bf16.mxu0 0
        %999 = vmatpush1.bf16.msra.mxu0 %v981
        %1000 = vmatprep.subr.bf16.mxu0 0
        %1001 = vmatpush1.bf16.msra.mxu0 %v982
        %1002 = vmatprep.subr.bf16.mxu0 0
        %1003 = vmatpush1.bf16.msra.mxu0 %v983
        %1004 = vmatprep.subr.bf16.mxu0 0
        %1005 = vmatpush1.bf16.msra.mxu0 %v984
        %1006 = vmatprep.subr.bf16.mxu0 0
        %1007 = vmatpush1.bf16.msra.mxu0 %v985
        %1008 = vmatprep.subr.bf16.mxu0 0
        %1009 = vmatpush1.bf16.msra.mxu0 %v986
        %1010 = vmatprep.subr.bf16.mxu0 0
        %1011 = vmatpush1.bf16.msra.mxu0 %v987
        %1012 = vmatprep.subr.bf16.mxu0 0
        %1013 = vmatpush1.bf16.msra.mxu0 0
        %1014 = vmatprep.subr.bf16.mxu0 0
        %1015 = vmatpush1.bf16.msra.mxu0 0
        %1016 = vmatprep.subr.bf16.mxu0 0
        %1017 = vmatpush1.bf16.msra.mxu0 0
        %1018 = vmatprep.subr.bf16.mxu0 0
        %1019 = vmatpush1.bf16.msra.mxu0 0
        %1020 = vmatprep.subr.bf16.mxu0 0
        %1021 = vmatpush1.bf16.msra.mxu0 0
        %1022 = vmatprep.subr.bf16.mxu0 0
        %1023 = vmatpush1.bf16.msra.mxu0 0
        %1024 = vmatprep.subr.bf16.mxu0 0
        %1025 = vmatpush1.bf16.msra.mxu0 0
        %1026 = vmatprep.subr.bf16.mxu0 0
        %1027 = vmatpush1.bf16.msra.mxu0 0
        %1028 = vmatprep.mubr.bf16.mxu0 0
        %1029 = vmatmul.mubr.bf16.gmra.mrb[0].mxu0 %v800
        %v1030 = vpop.f32.mrb[0].mxu0
        %v1031 = vadd.f32 %v927, %v1030
        %v1032 = vpop.f32.mrb[0].mxu0
        %v1033 = vpop.f32.mrb[0].mxu0
        %v1034 = vadd.f32 %v930, %v1033
        %v1035 = vpop.f32.mrb[0].mxu0
        %1036 = vmatprep.mubr.bf16.mxu0 0
        %1037 = vmatmul.mubr.bf16.gmra.mrb[0].mxu0 %v801
        %v1038 = vpop.f32.mrb[0].mxu0
        %v1039 = vadd.f32 %v935, %v1038
        %v1040 = vpop.f32.mrb[0].mxu0
        %v1041 = vpop.f32.mrb[0].mxu0
        %v1042 = vadd.f32 %v938, %v1041
        %v1043 = vpop.f32.mrb[0].mxu0
        %1044 = vmatprep.mubr.bf16.mxu0 0
        %1045 = vmatmul.mubr.bf16.gmra.mrb[0].mxu0 %v802
        %v1046 = vpop.f32.mrb[0].mxu0
        %v1047 = vadd.f32 %v943, %v1046
        %v1048 = vpop.f32.mrb[0].mxu0
        %v1049 = vpop.f32.mrb[0].mxu0
        %v1050 = vpop.f32.mrb[0].mxu0
        %1051 = vdwg.mxu0
        %v1052 = vld [vmem:[#allocation3 + $0x2] sm:$0xff]
        %v1053 = vld [vmem:[#allocation3 + $0xa] sm:$0xff]
        %v1054 = vld [vmem:[#allocation3 + $0x12] sm:$0xff]
        %v1055 = vld [vmem:[#allocation3 + $0x1a] sm:$0xff]
        %v1056 = vld [vmem:[#allocation3 + $0x22] sm:$0x3]
        %v1057 = vpack.c.bf16 %v1053, %v1052
        %v1058 = vpack.c.bf16 %v1055, %v1054
        %v1059 = vpack.c.bf16 %v1056, %v1056
        %s1060 = scalar_lea.vmem %s4, 128
        %v1061 = vld [vmem:[%s1060] sm:$0xf]
        %v1062 = vld [vmem:[%s1060 + $0x4] sm:$0xf]
        %v1063 = vld [vmem:[%s1060 + $0x8] sm:$0xf]
        %v1064 = vld [vmem:[%s1060 + $0xc] sm:$0xf]
        %v1065 = vld [vmem:[%s1060 + $0x10] sm:$0xf]
        %v1066 = vld [vmem:[%s1060 + $0x14] sm:$0xf]
        %v1067 = vld [vmem:[%s1060 + $0x18] sm:$0xf]
        %v1068 = vld [vmem:[%s1060 + $0x1c] sm:$0xf]
        %v1069 = vld [vmem:[%s1060 + $0x20] sm:$0xf]
        %v1070 = vld [vmem:[%s1060 + $0x24] sm:$0xf]
        %v1071 = vld [vmem:[%s1060 + $0x28] sm:$0xf]
        %v1072 = vld [vmem:[%s1060 + $0x2c] sm:$0xf]
        %v1073 = vld [vmem:[%s1060 + $0x30] sm:$0xf]
        %v1074 = vld [vmem:[%s1060 + $0x34] sm:$0xf]
        %v1075 = vld [vmem:[%s1060 + $0x38] sm:$0xf]
        %v1076 = vld [vmem:[%s1060 + $0x3c] sm:$0xf]
        %v1093 = vunpack.c.l.b16 %v1061
        %v1094 = vunpack.c.l.b16 %v1062
        %v1095 = vunpack.c.l.b16 %v1063
        %v1096 = vunpack.c.l.b16 %v1064
        %v1097 = vunpack.c.l.b16 %v1065
        %v1098 = vunpack.c.l.b16 %v1066
        %v1099 = vunpack.c.l.b16 %v1067
        %v1100 = vunpack.c.l.b16 %v1068
        %v1101 = vunpack.c.l.b16 %v1069
        %v1102 = vunpack.c.l.b16 %v1070
        %v1103 = vunpack.c.l.b16 %v1071
        %v1104 = vunpack.c.l.b16 %v1072
        %v1105 = vunpack.c.l.b16 %v1073
        %v1106 = vunpack.c.l.b16 %v1074
        %v1107 = vunpack.c.l.b16 %v1075
        %v1108 = vunpack.c.l.b16 %v1076
        %v1109 = vpack.c.b16 %v1094, %v1093
        %v1110 = vpack.c.b16 %v1096, %v1095
        %v1111 = vpack.c.b16 %v1098, %v1097
        %v1112 = vpack.c.b16 %v1100, %v1099
        %v1113 = vpack.c.b16 %v1102, %v1101
        %v1114 = vpack.c.b16 %v1104, %v1103
        %v1115 = vpack.c.b16 %v1106, %v1105
        %v1116 = vpack.c.b16 %v1108, %v1107
        %1125 = vmatprep.subr.bf16.mxu0 0
        %1126 = vmatpush1.bf16.msra.mxu0 %v1109
        %1127 = vmatprep.subr.bf16.mxu0 0
        %1128 = vmatpush1.bf16.msra.mxu0 %v1110
        %1129 = vmatprep.subr.bf16.mxu0 0
        %1130 = vmatpush1.bf16.msra.mxu0 %v1111
        %1131 = vmatprep.subr.bf16.mxu0 0
        %1132 = vmatpush1.bf16.msra.mxu0 %v1112
        %1133 = vmatprep.subr.bf16.mxu0 0
        %1134 = vmatpush1.bf16.msra.mxu0 %v1113
        %1135 = vmatprep.subr.bf16.mxu0 0
        %1136 = vmatpush1.bf16.msra.mxu0 %v1114
        %1137 = vmatprep.subr.bf16.mxu0 0
        %1138 = vmatpush1.bf16.msra.mxu0 %v1115
        %1139 = vmatprep.subr.bf16.mxu0 0
        %1140 = vmatpush1.bf16.msra.mxu0 %v1116
        %1141 = vmatprep.subr.bf16.mxu0 0
        %1142 = vmatpush1.bf16.msra.mxu0 0
        %1143 = vmatprep.subr.bf16.mxu0 0
        %1144 = vmatpush1.bf16.msra.mxu0 0
        %1145 = vmatprep.subr.bf16.mxu0 0
        %1146 = vmatpush1.bf16.msra.mxu0 0
        %1147 = vmatprep.subr.bf16.mxu0 0
        %1148 = vmatpush1.bf16.msra.mxu0 0
        %1149 = vmatprep.subr.bf16.mxu0 0
        %1150 = vmatpush1.bf16.msra.mxu0 0
        %1151 = vmatprep.subr.bf16.mxu0 0
        %1152 = vmatpush1.bf16.msra.mxu0 0
        %1153 = vmatprep.subr.bf16.mxu0 0
        %1154 = vmatpush1.bf16.msra.mxu0 0
        %1155 = vmatprep.subr.bf16.mxu0 0
        %1156 = vmatpush1.bf16.msra.mxu0 0
        %1157 = vmatprep.mubr.bf16.mxu0 0
        %1158 = vmatmul.mubr.bf16.gmra.mrb[0].mxu0 %v1057
        %v1159 = vpop.f32.mrb[0].mxu0
        %v1160 = vadd.f32 0.0, %v1159
        %v1161 = vpop.f32.mrb[0].mxu0
        %v1162 = vpop.f32.mrb[0].mxu0
        %v1163 = vadd.f32 0.0, %v1162
        %v1164 = vpop.f32.mrb[0].mxu0
        %1165 = vmatprep.mubr.bf16.mxu0 0
        %1166 = vmatmul.mubr.bf16.gmra.mrb[0].mxu0 %v1058
        %v1167 = vpop.f32.mrb[0].mxu0
        %v1168 = vadd.f32 0.0, %v1167
        %v1169 = vpop.f32.mrb[0].mxu0
        %v1170 = vpop.f32.mrb[0].mxu0
        %v1171 = vadd.f32 0.0, %v1170
        %v1172 = vpop.f32.mrb[0].mxu0
        %1173 = vmatprep.mubr.bf16.mxu0 0
        %1174 = vmatmul.mubr.bf16.gmra.mrb[0].mxu0 %v1059
        %v1175 = vpop.f32.mrb[0].mxu0
        %v1176 = vadd.f32 0.0, %v1175
        %v1177 = vpop.f32.mrb[0].mxu0
        %v1178 = vpop.f32.mrb[0].mxu0
        %v1179 = vpop.f32.mrb[0].mxu0
        %1180 = vdwg.mxu0
        %v1181 = vadd.f32 %v1031, %v1160
        %v1182 = vadd.f32 %v1034, %v1163
        %v1183 = vadd.f32 %v1039, %v1168
        %v1184 = vadd.f32 %v1042, %v1171
        %v1185 = vadd.f32 %v1047, %v1176
        %v1186 = vld [vmem:[%s5] sm:$0x1]
        %v1188 = vlaneseq
        %v1189 = vshrl.u32 %v1188, 7
        %v1190 = vsub.s32 0, %v1189
        %v1191 = vrot.slane %v1186, %v1190
        %v1193 = vmul.f32 %v1181, %v1191
        %v1194 = vmul.f32 %v1182, %v1191
        %v1195 = vmul.f32 %v1183, %v1191
        %v1196 = vmul.f32 %v1184, %v1191
        %v1197 = vmul.f32 %v1185, %v1191
        %v1198 = vld [vmem:[%s6] sm:$0x1]
        %v1200 = vlaneseq
        %v1201 = vshrl.u32 %v1200, 7
        %v1202 = vsub.s32 0, %v1201
        %v1203 = vrot.slane %v1198, %v1202
        %v1205 = vadd.f32 %v1193, %v1203
        %v1206 = vadd.f32 %v1194, %v1203
        %v1207 = vadd.f32 %v1195, %v1203
        %v1208 = vadd.f32 %v1196, %v1203
        %v1209 = vadd.f32 %v1197, %v1203
        %v1210 = vmax.f32 %v1205, 0.0
        %v1211 = vmax.f32 %v1206, 0.0
        %v1212 = vmax.f32 %v1207, 0.0
        %v1213 = vmax.f32 %v1208, 0.0
        %v1214 = vmax.f32 %v1209, 0.0
        %1215 = vst [vmem:[%s409] sm:$0xff] %v1210
        %1216 = vst [vmem:[%s409 + $0x8] sm:$0xff] %v1211
        %s1217 = scalar_lea.vmem %s409, 16 [#allocation7]
        %1218 = vst [vmem:[%s1217 - $0x2] sm:$0xfc] %v1212
        %1219 = vst [vmem:[%s1217 + $0x6] sm:$0xff] %v1213
        %1220 = vst [vmem:[%s1217 + $0xe] sm:$0x3] %v1214
        %1221 = vst [vmem:[#allocation3 + $0x1] sm:$0xff] %v1210
        %1222 = vst [vmem:[#allocation3 + $0x9] sm:$0xff] %v1211
        %1223 = vst [vmem:[#allocation3 + $0x11] sm:$0xff] %v1212
        %1224 = vst [vmem:[#allocation3 + $0x19] sm:$0xff] %v1213
        %1225 = vst [vmem:[#allocation3 + $0x21] sm:$0x3] %v1214
        %1226 = vst [vmem:[#allocation3] sm:$0x1] 0.0
        %1227 = vst [vmem:[#allocation3 + $0x23] sm:$0x1] 0.0
        %1228 = vst [vmem:[#allocation3 + $0x11] sm:$0x3] 0.0
        %v1229 = vld [vmem:[#allocation3] ss:$2 sm:$0xff]
        %s1230 = scalar_lea.vmem [#allocation3], 16
        %v1231 = vld [vmem:[%s1230] ss:$2 sm:$0xff]
        %s1232 = scalar_lea.vmem [#allocation3], 32
        %v1233 = vld [vmem:[%s1232] ss:$2 sm:$0x1]
        %v1234 = vpack.c.bf16 %v1231, %v1229
        %v1235 = vpack.c.bf16 %v1233, %v1233
        %v1236 = vld [vmem:[%s7] sm:$0xf]
        %v1237 = vld [vmem:[%s7 + $0x4] sm:$0xf]
        %v1238 = vld [vmem:[%s7 + $0x8] sm:$0xf]
        %v1239 = vld [vmem:[%s7 + $0xc] sm:$0xf]
        %v1240 = vld [vmem:[%s7 + $0x10] sm:$0xf]
        %v1241 = vld [vmem:[%s7 + $0x14] sm:$0xf]
        %v1242 = vld [vmem:[%s7 + $0x18] sm:$0xf]
        %v1243 = vld [vmem:[%s7 + $0x1c] sm:$0xf]
        %v1244 = vld [vmem:[%s7 + $0x20] sm:$0xf]
        %v1245 = vld [vmem:[%s7 + $0x24] sm:$0xf]
        %v1246 = vld [vmem:[%s7 + $0x28] sm:$0xf]
        %v1247 = vld [vmem:[%s7 + $0x2c] sm:$0xf]
        %v1248 = vld [vmem:[%s7 + $0x30] sm:$0xf]
        %v1249 = vld [vmem:[%s7 + $0x34] sm:$0xf]
        %v1250 = vld [vmem:[%s7 + $0x38] sm:$0xf]
        %v1251 = vld [vmem:[%s7 + $0x3c] sm:$0xf]
        %s1252 = scalar_lea.vmem [#allocation3], 1
        %v1253 = vld [vmem:[%s1252] ss:$2 sm:$0xff]
        %s1254 = scalar_lea.vmem [#allocation3], 17
        %v1255 = vld [vmem:[%s1254] ss:$2 sm:$0xff]
        %s1256 = scalar_lea.vmem [#allocation3], 33
        %v1257 = vld [vmem:[%s1256] ss:$2 sm:$0x1]
        %v1258 = vpack.c.bf16 %v1255, %v1253
        %v1259 = vpack.c.bf16 %v1257, %v1257
        %s1260 = scalar_lea.vmem %s7, 64
        %v1261 = vld [vmem:[%s1260] sm:$0xf]
        %v1262 = vld [vmem:[%s1260 + $0x4] sm:$0xf]
        %v1263 = vld [vmem:[%s1260 + $0x8] sm:$0xf]
        %v1264 = vld [vmem:[%s1260 + $0xc] sm:$0xf]
        %v1265 = vld [vmem:[%s1260 + $0x10] sm:$0xf]
        %v1266 = vld [vmem:[%s1260 + $0x14] sm:$0xf]
        %v1267 = vld [vmem:[%s1260 + $0x18] sm:$0xf]
        %v1268 = vld [vmem:[%s1260 + $0x1c] sm:$0xf]
        %v1269 = vld [vmem:[%s1260 + $0x20] sm:$0xf]
        %v1270 = vld [vmem:[%s1260 + $0x24] sm:$0xf]
        %v1271 = vld [vmem:[%s1260 + $0x28] sm:$0xf]
        %v1272 = vld [vmem:[%s1260 + $0x2c] sm:$0xf]
        %v1273 = vld [vmem:[%s1260 + $0x30] sm:$0xf]
        %v1274 = vld [vmem:[%s1260 + $0x34] sm:$0xf]
        %v1275 = vld [vmem:[%s1260 + $0x38] sm:$0xf]
        %v1276 = vld [vmem:[%s1260 + $0x3c] sm:$0xf]
        %v1293 = vunpack.c.l.b16 %v1261
        %v1294 = vunpack.c.l.b16 %v1262
        %v1295 = vunpack.c.l.b16 %v1263
        %v1296 = vunpack.c.l.b16 %v1264
        %v1297 = vunpack.c.l.b16 %v1265
        %v1298 = vunpack.c.l.b16 %v1266
        %v1299 = vunpack.c.l.b16 %v1267
        %v1300 = vunpack.c.l.b16 %v1268
        %v1301 = vunpack.c.l.b16 %v1269
        %v1302 = vunpack.c.l.b16 %v1270
        %v1303 = vunpack.c.l.b16 %v1271
        %v1304 = vunpack.c.l.b16 %v1272
        %v1305 = vunpack.c.l.b16 %v1273
        %v1306 = vunpack.c.l.b16 %v1274
        %v1307 = vunpack.c.l.b16 %v1275
        %v1308 = vunpack.c.l.b16 %v1276
        %v1309 = vpack.c.b16 %v1294, %v1293
        %v1310 = vpack.c.b16 %v1296, %v1295
        %v1311 = vpack.c.b16 %v1298, %v1297
        %v1312 = vpack.c.b16 %v1300, %v1299
        %v1313 = vpack.c.b16 %v1302, %v1301
        %v1314 = vpack.c.b16 %v1304, %v1303
        %v1315 = vpack.c.b16 %v1306, %v1305
        %v1316 = vpack.c.b16 %v1308, %v1307
        %1325 = vmatprep.subr.bf16.mxu0 0
        %1326 = vmatpush1.bf16.msra.mxu0 %v1309
        %1327 = vmatprep.subr.bf16.mxu0 0
        %1328 = vmatpush1.bf16.msra.mxu0 %v1310
        %1329 = vmatprep.subr.bf16.mxu0 0
        %1330 = vmatpush1.bf16.msra.mxu0 %v1311
        %1331 = vmatprep.subr.bf16.mxu0 0
        %1332 = vmatpush1.bf16.msra.mxu0 %v1312
        %1333 = vmatprep.subr.bf16.mxu0 0
        %1334 = vmatpush1.bf16.msra.mxu0 %v1313
        %1335 = vmatprep.subr.bf16.mxu0 0
        %1336 = vmatpush1.bf16.msra.mxu0 %v1314
        %1337 = vmatprep.subr.bf16.mxu0 0
        %1338 = vmatpush1.bf16.msra.mxu0 %v1315
        %1339 = vmatprep.subr.bf16.mxu0 0
        %1340 = vmatpush1.bf16.msra.mxu0 %v1316
        %1341 = vmatprep.subr.bf16.mxu0 0
        %1342 = vmatpush1.bf16.msra.mxu0 0
        %1343 = vmatprep.subr.bf16.mxu0 0
        %1344 = vmatpush1.bf16.msra.mxu0 0
        %1345 = vmatprep.subr.bf16.mxu0 0
        %1346 = vmatpush1.bf16.msra.mxu0 0
        %1347 = vmatprep.subr.bf16.mxu0 0
        %1348 = vmatpush1.bf16.msra.mxu0 0
        %1349 = vmatprep.subr.bf16.mxu0 0
        %1350 = vmatpush1.bf16.msra.mxu0 0
        %1351 = vmatprep.subr.bf16.mxu0 0
        %1352 = vmatpush1.bf16.msra.mxu0 0
        %1353 = vmatprep.subr.bf16.mxu0 0
        %1354 = vmatpush1.bf16.msra.mxu0 0
        %1355 = vmatprep.subr.bf16.mxu0 0
        %1356 = vmatpush1.bf16.msra.mxu0 0
        %1357 = vmatprep.mubr.bf16.mxu0 0
        %1358 = vmatmul.mubr.bf16.gmra.mrb[0].mxu0 %v1258
        %v1359 = vpop.f32.mrb[0].mxu0
        %v1360 = vadd.f32 0.0, %v1359
        %v1361 = vpop.f32.mrb[0].mxu0
        %v1362 = vpop.f32.mrb[0].mxu0
        %v1363 = vadd.f32 0.0, %v1362
        %v1364 = vpop.f32.mrb[0].mxu0
        %1365 = vmatprep.mubr.bf16.mxu0 0
        %1366 = vmatmul.mubr.bf16.gmra.mrb[0].mxu0 %v1259
        %v1367 = vpop.f32.mrb[0].mxu0
        %v1368 = vadd.f32 0.0, %v1367
        %v1369 = vpop.f32.mrb[0].mxu0
        %v1370 = vpop.f32.mrb[0].mxu0
        %v1371 = vpop.f32.mrb[0].mxu0
        %1372 = vdwg.mxu0
        %v1389 = vunpack.c.l.b16 %v1236
        %v1390 = vunpack.c.l.b16 %v1237
        %v1391 = vunpack.c.l.b16 %v1238
        %v1392 = vunpack.c.l.b16 %v1239
        %v1393 = vunpack.c.l.b16 %v1240
        %v1394 = vunpack.c.l.b16 %v1241
        %v1395 = vunpack.c.l.b16 %v1242
        %v1396 = vunpack.c.l.b16 %v1243
        %v1397 = vunpack.c.l.b16 %v1244
        %v1398 = vunpack.c.l.b16 %v1245
        %v1399 = vunpack.c.l.b16 %v1246
        %v1400 = vunpack.c.l.b16 %v1247
        %v1401 = vunpack.c.l.b16 %v1248
        %v1402 = vunpack.c.l.b16 %v1249
        %v1403 = vunpack.c.l.b16 %v1250
        %v1404 = vunpack.c.l.b16 %v1251
        %v1405 = vpack.c.b16 %v1390, %v1389
        %v1406 = vpack.c.b16 %v1392, %v1391
        %v1407 = vpack.c.b16 %v1394, %v1393
        %v1408 = vpack.c.b16 %v1396, %v1395
        %v1409 = vpack.c.b16 %v1398, %v1397
        %v1410 = vpack.c.b16 %v1400, %v1399
        %v1411 = vpack.c.b16 %v1402, %v1401
        %v1412 = vpack.c.b16 %v1404, %v1403
        %1421 = vmatprep.subr.bf16.mxu0 0
        %1422 = vmatpush1.bf16.msra.mxu0 %v1405
        %1423 = vmatprep.subr.bf16.mxu0 0
        %1424 = vmatpush1.bf16.msra.mxu0 %v1406
        %1425 = vmatprep.subr.bf16.mxu0 0
        %1426 = vmatpush1.bf16.msra.mxu0 %v1407
        %1427 = vmatprep.subr.bf16.mxu0 0
        %1428 = vmatpush1.bf16.msra.mxu0 %v1408
        %1429 = vmatprep.subr.bf16.mxu0 0
        %1430 = vmatpush1.bf16.msra.mxu0 %v1409
        %1431 = vmatprep.subr.bf16.mxu0 0
        %1432 = vmatpush1.bf16.msra.mxu0 %v1410
        %1433 = vmatprep.subr.bf16.mxu0 0
        %1434 = vmatpush1.bf16.msra.mxu0 %v1411
        %1435 = vmatprep.subr.bf16.mxu0 0
        %1436 = vmatpush1.bf16.msra.mxu0 %v1412
        %1437 = vmatprep.subr.bf16.mxu0 0
        %1438 = vmatpush1.bf16.msra.mxu0 0
        %1439 = vmatprep.subr.bf16.mxu0 0
        %1440 = vmatpush1.bf16.msra.mxu0 0
        %1441 = vmatprep.subr.bf16.mxu0 0
        %1442 = vmatpush1.bf16.msra.mxu0 0
        %1443 = vmatprep.subr.bf16.mxu0 0
        %1444 = vmatpush1.bf16.msra.mxu0 0
        %1445 = vmatprep.subr.bf16.mxu0 0
        %1446 = vmatpush1.bf16.msra.mxu0 0
        %1447 = vmatprep.subr.bf16.mxu0 0
        %1448 = vmatpush1.bf16.msra.mxu0 0
        %1449 = vmatprep.subr.bf16.mxu0 0
        %1450 = vmatpush1.bf16.msra.mxu0 0
        %1451 = vmatprep.subr.bf16.mxu0 0
        %1452 = vmatpush1.bf16.msra.mxu0 0
        %1453 = vmatprep.mubr.bf16.mxu0 0
        %1454 = vmatmul.mubr.bf16.gmra.mrb[0].mxu0 %v1234
        %v1455 = vpop.f32.mrb[0].mxu0
        %v1456 = vadd.f32 %v1360, %v1455
        %v1457 = vpop.f32.mrb[0].mxu0
        %v1458 = vpop.f32.mrb[0].mxu0
        %v1459 = vadd.f32 %v1363, %v1458
        %v1460 = vpop.f32.mrb[0].mxu0
        %1461 = vmatprep.mubr.bf16.mxu0 0
        %1462 = vmatmul.mubr.bf16.gmra.mrb[0].mxu0 %v1235
        %v1463 = vpop.f32.mrb[0].mxu0
        %v1464 = vadd.f32 %v1368, %v1463
        %v1465 = vpop.f32.mrb[0].mxu0
        %v1466 = vpop.f32.mrb[0].mxu0
        %v1467 = vpop.f32.mrb[0].mxu0
        %1468 = vdwg.mxu0
        %s1469 = scalar_lea.vmem [#allocation3], 2
        %v1470 = vld [vmem:[%s1469] ss:$2 sm:$0xff]
        %s1471 = scalar_lea.vmem [#allocation3], 18
        %v1472 = vld [vmem:[%s1471] ss:$2 sm:$0xff]
        %s1473 = scalar_lea.vmem [#allocation3], 34
        %v1474 = vld [vmem:[%s1473] ss:$2 sm:$0x1]
        %v1475 = vpack.c.bf16 %v1472, %v1470
        %v1476 = vpack.c.bf16 %v1474, %v1474
        %s1477 = scalar_lea.vmem %s7, 128
        %v1478 = vld [vmem:[%s1477] sm:$0xf]
        %v1479 = vld [vmem:[%s1477 + $0x4] sm:$0xf]
        %v1480 = vld [vmem:[%s1477 + $0x8] sm:$0xf]
        %v1481 = vld [vmem:[%s1477 + $0xc] sm:$0xf]
        %v1482 = vld [vmem:[%s1477 + $0x10] sm:$0xf]
        %v1483 = vld [vmem:[%s1477 + $0x14] sm:$0xf]
        %v1484 = vld [vmem:[%s1477 + $0x18] sm:$0xf]
        %v1485 = vld [vmem:[%s1477 + $0x1c] sm:$0xf]
        %v1486 = vld [vmem:[%s1477 + $0x20] sm:$0xf]
        %v1487 = vld [vmem:[%s1477 + $0x24] sm:$0xf]
        %v1488 = vld [vmem:[%s1477 + $0x28] sm:$0xf]
        %v1489 = vld [vmem:[%s1477 + $0x2c] sm:$0xf]
        %v1490 = vld [vmem:[%s1477 + $0x30] sm:$0xf]
        %v1491 = vld [vmem:[%s1477 + $0x34] sm:$0xf]
        %v1492 = vld [vmem:[%s1477 + $0x38] sm:$0xf]
        %v1493 = vld [vmem:[%s1477 + $0x3c] sm:$0xf]
        %v1510 = vunpack.c.l.b16 %v1478
        %v1511 = vunpack.c.l.b16 %v1479
        %v1512 = vunpack.c.l.b16 %v1480
        %v1513 = vunpack.c.l.b16 %v1481
        %v1514 = vunpack.c.l.b16 %v1482
        %v1515 = vunpack.c.l.b16 %v1483
        %v1516 = vunpack.c.l.b16 %v1484
        %v1517 = vunpack.c.l.b16 %v1485
        %v1518 = vunpack.c.l.b16 %v1486
        %v1519 = vunpack.c.l.b16 %v1487
        %v1520 = vunpack.c.l.b16 %v1488
        %v1521 = vunpack.c.l.b16 %v1489
        %v1522 = vunpack.c.l.b16 %v1490
        %v1523 = vunpack.c.l.b16 %v1491
        %v1524 = vunpack.c.l.b16 %v1492
        %v1525 = vunpack.c.l.b16 %v1493
        %v1526 = vpack.c.b16 %v1511, %v1510
        %v1527 = vpack.c.b16 %v1513, %v1512
        %v1528 = vpack.c.b16 %v1515, %v1514
        %v1529 = vpack.c.b16 %v1517, %v1516
        %v1530 = vpack.c.b16 %v1519, %v1518
        %v1531 = vpack.c.b16 %v1521, %v1520
        %v1532 = vpack.c.b16 %v1523, %v1522
        %v1533 = vpack.c.b16 %v1525, %v1524
        %1542 = vmatprep.subr.bf16.mxu0 0
        %1543 = vmatpush1.bf16.msra.mxu0 %v1526
        %1544 = vmatprep.subr.bf16.mxu0 0
        %1545 = vmatpush1.bf16.msra.mxu0 %v1527
        %1546 = vmatprep.subr.bf16.mxu0 0
        %1547 = vmatpush1.bf16.msra.mxu0 %v1528
        %1548 = vmatprep.subr.bf16.mxu0 0
        %1549 = vmatpush1.bf16.msra.mxu0 %v1529
        %1550 = vmatprep.subr.bf16.mxu0 0
        %1551 = vmatpush1.bf16.msra.mxu0 %v1530
        %1552 = vmatprep.subr.bf16.mxu0 0
        %1553 = vmatpush1.bf16.msra.mxu0 %v1531
        %1554 = vmatprep.subr.bf16.mxu0 0
        %1555 = vmatpush1.bf16.msra.mxu0 %v1532
        %1556 = vmatprep.subr.bf16.mxu0 0
        %1557 = vmatpush1.bf16.msra.mxu0 %v1533
        %1558 = vmatprep.subr.bf16.mxu0 0
        %1559 = vmatpush1.bf16.msra.mxu0 0
        %1560 = vmatprep.subr.bf16.mxu0 0
        %1561 = vmatpush1.bf16.msra.mxu0 0
        %1562 = vmatprep.subr.bf16.mxu0 0
        %1563 = vmatpush1.bf16.msra.mxu0 0
        %1564 = vmatprep.subr.bf16.mxu0 0
        %1565 = vmatpush1.bf16.msra.mxu0 0
        %1566 = vmatprep.subr.bf16.mxu0 0
        %1567 = vmatpush1.bf16.msra.mxu0 0
        %1568 = vmatprep.subr.bf16.mxu0 0
        %1569 = vmatpush1.bf16.msra.mxu0 0
        %1570 = vmatprep.subr.bf16.mxu0 0
        %1571 = vmatpush1.bf16.msra.mxu0 0
        %1572 = vmatprep.subr.bf16.mxu0 0
        %1573 = vmatpush1.bf16.msra.mxu0 0
        %1574 = vmatprep.mubr.bf16.mxu0 0
        %1575 = vmatmul.mubr.bf16.gmra.mrb[0].mxu0 %v1475
        %v1576 = vpop.f32.mrb[0].mxu0
        %v1577 = vadd.f32 0.0, %v1576
        %v1578 = vpop.f32.mrb[0].mxu0
        %v1579 = vpop.f32.mrb[0].mxu0
        %v1580 = vadd.f32 0.0, %v1579
        %v1581 = vpop.f32.mrb[0].mxu0
        %1582 = vmatprep.mubr.bf16.mxu0 0
        %1583 = vmatmul.mubr.bf16.gmra.mrb[0].mxu0 %v1476
        %v1584 = vpop.f32.mrb[0].mxu0
        %v1585 = vadd.f32 0.0, %v1584
        %v1586 = vpop.f32.mrb[0].mxu0
        %v1587 = vpop.f32.mrb[0].mxu0
        %v1588 = vpop.f32.mrb[0].mxu0
        %1589 = vdwg.mxu0
        %v1590 = vadd.f32 %v1456, %v1577
        %v1591 = vadd.f32 %v1459, %v1580
        %v1592 = vadd.f32 %v1464, %v1585
        %v1593 = vld [vmem:[%s8] sm:$0x1]
        %v1595 = vlaneseq
        %v1596 = vshrl.u32 %v1595, 7
        %v1597 = vsub.s32 0, %v1596
        %v1598 = vrot.slane %v1593, %v1597
        %v1600 = vmul.f32 %v1590, %v1598
        %v1601 = vmul.f32 %v1591, %v1598
        %v1602 = vmul.f32 %v1592, %v1598
        %v1603 = vld [vmem:[%s9] sm:$0x1]
        %v1605 = vlaneseq
        %v1606 = vshrl.u32 %v1605, 7
        %v1607 = vsub.s32 0, %v1606
        %v1608 = vrot.slane %v1603, %v1607
        %v1610 = vadd.f32 %v1600, %v1608
        %v1611 = vadd.f32 %v1601, %v1608
        %v1612 = vadd.f32 %v1602, %v1608
        %v1613 = vmax.f32 %v1610, 0.0
        %v1614 = vmax.f32 %v1611, 0.0
        %v1615 = vmax.f32 %v1612, 0.0
        %1616 = vst.msk [vmem:[%s416] sm:$0xff] %vm428, %v1613
        %s1617 = scalar_lea.vmem %s416, 8 [#allocation8]
        %vm1618 = vcmask 523265
        %1619 = vst.msk [vmem:[%s1617 - $0x1] sm:$0xfe] %vm1618, %v1614
        %1620 = vst.msk [vmem:[%s1617 + $0x7] sm:$0x1] %vm421, %v1615
        %s1621 = sand.u32 %s255, 1
        %s1622 = scalar_lea.sflag [#allocation6], %s1621
        %s1623 = sand.u32 %s255, 1
        %s1624 = smul.addr %s1623, 32
        %s1625 = scalar_lea.vmem [#allocation7], %s1624
        %s1626 = sand.u32 %s281, 1
        %s1627 = scalar_lea.sflag [#allocation9], %s1626
        %s1628 = sand.u32 %s281, 1
        %s1629 = smul.addr %s1628, 16
        %s1630 = scalar_lea.vmem [#allocation8], %s1629
        // Predicated region
        $region65: #{tpu_custom_call.1} parent=59 // pred_check
          %p1631 = pneg %p265
        $region66: #{tpu_custom_call.1} parent=59 // pred_check_branch
          %1633 = sbr.rel (%p1631) target = $region68
        $region67: #{tpu_custom_call.1} parent=59 // pred_region
          %s1634 = smul.u32 2, %s32
          %s1636 = ssub.s32 512, 512
          %1637 = vsyncadd %s1622, %s1636
          %s1638 = smul.addr %s1634, 2
          %s1639 = smul.addr %s1638, 128
          %s1640 = scalar_lea.hbm %s10, %s1639
          %s1641 = sshll.u32 %s1625, 4
          %s1642 = int_to_ptr.vmem [resolvable:$true] %s1641
          %1647 = dma.vmem_to_hbm [thread:$0]  %s1642, 512, %s1640, %s1622, 128, 128, 8
        $region68: #{tpu_custom_call.1} parent=59 // pred_fallthru
          _
        // Predicated region
        $region69: #{tpu_custom_call.1} parent=59 // pred_check
          %p1648 = pneg %p291
        $region70: #{tpu_custom_call.1} parent=59 // pred_check_branch
          %1650 = sbr.rel (%p1648) target = $region72
        $region71: #{tpu_custom_call.1} parent=59 // pred_region
          %s1651 = smul.u32 2, %s32
          %s1653 = ssub.s32 256, 256
          %1654 = vsyncadd %s1627, %s1653
          %s1655 = smul.addr %s1651, 128
          %s1656 = scalar_lea.hbm %s11, %s1655
          %s1657 = sshll.u32 %s1630, 4
          %s1658 = int_to_ptr.vmem [resolvable:$true] %s1657
          %1663 = dma.vmem_to_hbm [thread:$0]  %s1658, 256, %s1656, %s1627, 128, 128, 8
        $region72: #{tpu_custom_call.1} parent=59 // pred_fallthru
          _
      $region60: #{tpu_custom_call.1} parent=5 // pred_fallthru
        _
      %p1664 = scmp.le.s32.totalorder 2, %s27
      // Predicated region
      $region73: #{tpu_custom_call.1} parent=5 // pred_check
        %p1665 = pneg %p1664
      $region74: #{tpu_custom_call.1} parent=5 // pred_check_branch
        %1667 = sbr.rel (%p1665) target = $region76
      $region75: #{tpu_custom_call.1} parent=5 // pred_region
        %s1668 = ssub.s32 %s27, 2
        // Predicated region
        $region77: #{tpu_custom_call.1} parent=75 // pred_check
          %p1669 = pneg %p271
        $region78: #{tpu_custom_call.1} parent=75 // pred_check_branch
          %1671 = sbr.rel (%p1669) target = $region80
        $region79: #{tpu_custom_call.1} parent=75 // pred_region
          %s1672 = sand.u32 %s256, 1
          %s1673 = scalar_lea.sflag [#allocation6], %s1672
          %s1674 = sand.u32 %s256, 1
          %s1675 = smul.addr %s1674, 32
          %s1676 = scalar_lea.vmem [#allocation7], %s1675
          %1677 = dma.done %s1673, 512
        $region80: #{tpu_custom_call.1} parent=75 // pred_fallthru
          _
        // Predicated region
        $region81: #{tpu_custom_call.1} parent=75 // pred_check
          %p1678 = pneg %p297
        $region82: #{tpu_custom_call.1} parent=75 // pred_check_branch
          %1680 = sbr.rel (%p1678) target = $region84
        $region83: #{tpu_custom_call.1} parent=75 // pred_region
          %s1681 = sand.u32 %s282, 1
          %s1682 = scalar_lea.sflag [#allocation9], %s1681
          %s1683 = sand.u32 %s282, 1
          %s1684 = smul.addr %s1683, 16
          %s1685 = scalar_lea.vmem [#allocation8], %s1684
          %1686 = dma.done %s1682, 256
        $region84: #{tpu_custom_call.1} parent=75 // pred_fallthru
          _
      $region76: #{tpu_custom_call.1} parent=5 // pred_fallthru
        _
    $region6: #{tpu_custom_call.1} parent=1 // loop_footer
      %s31 = sadd.s32 1, %s27
    $region7: #{tpu_custom_call.1} parent=1 // loop_footer_branch
      %26 = sbr.rel target = $region3
    $region8: #{tpu_custom_call.1} parent=1 // loop_exit
      _
    %1687 = vsyncpa [#allocation5], 1
    %s1688 = scalar_lea.sflag [#allocation5], 1
    %1689 = vsyncpa %s1688, 1
    %1690 = vsyncpa [#allocation6], 1
    %s1691 = scalar_lea.sflag [#allocation6], 1
    %1692 = vsyncpa %s1691, 1
    %1693 = vsyncpa [#allocation9], 1
    %s1694 = scalar_lea.sflag [#allocation9], 1
    %1695 = vsyncpa %s1694, 1

</llo_original>
